<compile_context>
chip_gen: v7x
topology: tpu7x:2x2x1
jax: 0.10.0
libtpu: 0.0.40
codegen_flags: <defaults>
</compile_context>

<pallas_src>
import jax
import jax.numpy as jnp
from jax.experimental import pallas as pl
from jax.experimental.pallas import tpu as pltpu

MIN_SAMPLES = 4        # sklearn counts the point itself
MIN_CLUSTER = 30       # clusters smaller than this are discarded
NUM_CHANNELS = 26
BIG = 2 ** 30 - 1      # Python int -> jaxpr literal (never a captured constant)
CHECK_EVERY = 8        # propagation passes between convergence checks


def _round_up(x, m):
    return ((x + m - 1) // m) * m


def _sum3(x, axis):
    # 3-tap window sum along one axis (2 rolls); wrap-around hits inactive padding.
    return x + jnp.roll(x, 1, axis) + jnp.roll(x, -1, axis)


def _min3(x, axis):
    return jnp.minimum(x, jnp.minimum(jnp.roll(x, 1, axis), jnp.roll(x, -1, axis)))


def _min3x3(x):
    # separable 3x3 window min: 2 sublane rolls + 2 lane rolls (vs ~8 diagonal rolls)
    return _min3(_min3(x, 0), 1)


def _dbscan_label_kernel(act_ref, labels_ref, grid_ref):
    """3x3 density count + connected components via min-label propagation.

    Output is the full (8,128)-aligned padded grid (lane-dense, unmasked stores);
    padding cells are never active and come out as -1.
    """
    H, W = act_ref.shape            # true image size
    Hp, Wp = labels_ref.shape       # (8,128)-aligned padded working grid, Hp>H, Wp>W

    # Build the zero-padded working grid in VMEM scratch.  Padding rows/cols are
    # never active, which makes roll wrap-around safe for both count and min.
    grid_ref[...] = jnp.zeros((Hp, Wp), jnp.int32)
    grid_ref[0:H, 0:W] = act_ref[...].astype(jnp.int32)
    act_i = grid_ref[...]
    active = act_i > 0

    # core: >= MIN_SAMPLES active pixels within eps=1.5 (the 3x3 window, incl. self)
    cnt = _sum3(_sum3(act_i, 0), 1)
    core = jnp.logical_and(active, cnt >= MIN_SAMPLES)

    row = jax.lax.broadcasted_iota(jnp.int32, (Hp, Wp), 0)
    col = jax.lax.broadcasted_iota(jnp.int32, (Hp, Wp), 1)
    lab0 = jnp.where(core, row * Wp + col, BIG)     # requires Hp*Wp < 2**30

    def prop_block(lab):
        for _ in range(CHECK_EVERY):                # unrolled at trace time
            lab = jnp.where(core, _min3x3(lab), BIG)
        return lab

    def num_changed(new, old):
        # labels only decrease; global reduce -> scalar (full-array check)
        return jnp.sum(jnp.where(new != old, 1, 0)) > 0

    # Convergence-checked propagation (instead of a fixed Hp*Wp-iteration bound).
    lab1 = prop_block(lab0)
    carry0 = (lab1, num_changed(lab1, lab0))

    def cond(carry):
        return carry[1]

    def body(carry):
        lab, _ = carry
        new = prop_block(lab)
        return new, num_changed(new, lab)

    lab, _ = jax.lax.while_loop(cond, body, carry0)

    # border points attach to the min-label core neighbour; the rest is noise.
    nbr_min = _min3x3(lab)                          # centre is BIG for non-core
    border = jnp.logical_and(jnp.logical_and(active, jnp.logical_not(core)),
                             nbr_min < BIG)
    labels_ref[...] = jnp.where(core, lab, jnp.where(border, nbr_min, -1))


def _onehot_kernel(chan_ref, out_ref):
    """Lane-dense one-hot on one lane chunk: out[c, p] = (chan[p] == c)."""
    C, chunk = out_ref.shape
    chan = chan_ref[...]                                         # (1, chunk) int32
    cidx = jax.lax.broadcasted_iota(jnp.int32, (C, chunk), 0)    # (C, chunk)
    out_ref[...] = (chan == cidx).astype(jnp.uint8)


def dbscan_cluster(mask):
    """JAX/Pallas equivalent of DBSCAN_cluster.forward (eps=1.5, min_samples=4)."""
    H, W = mask.shape
    # threshold outside the kernel; ship a compact int8 mask (4x fewer DMA bytes)
    act = (mask > 0.1).astype(jnp.int8)

    # working grid: >= (H+1, W+1) and aligned to (8, 128) -> unmasked rotates/stores
    Hp = _round_up(H + 1, 8)
    Wp = _round_up(W + 1, 128)
    assert Hp * Wp < BIG, "image too large for int32 pixel labels"

    # keep the resident working set comfortably under v7x's 64 MiB physical VMEM
    vmem_est = 24 * Hp * Wp * 4
    vmem_limit = int(min(max(vmem_est, 8 << 20), 48 << 20))

    labels = pl.pallas_call(
        _dbscan_label_kernel,
        out_shape=jax.ShapeDtypeStruct((Hp, Wp), jnp.int32),
        grid=(1,),
        in_specs=[pl.BlockSpec((H, W), lambda i: (0, 0))],
        out_specs=pl.BlockSpec((Hp, Wp), lambda i: (0, 0)),
        scratch_shapes=[pltpu.VMEM((Hp, Wp), jnp.int32)],
        compiler_params=pltpu.CompilerParams(
            dimension_semantics=("arbitrary",),
            vmem_limit_bytes=vmem_limit),
    )(act)

    # ---- per-cluster statistics / filtering / ordering (XLA glue) -------------
    # TODO(synk): per-cluster size & mean-column histogram + argsort stay in XLA
    # (data-dependent scatter/sort has no clean Pallas equivalent here); labels
    # are compacted to [0, H*W) to keep the scatter/sort domain minimal.
    L = H * W
    HWp = Hp * Wp
    lab_flat = labels.reshape(-1)                         # padded cells are -1
    valid = lab_flat >= 0
    safe = jnp.where(valid, lab_flat, 0)
    rep_r = safe // Wp
    rep_c = safe % Wp
    idx = rep_r * W + rep_c                               # compact id in [0, H*W)
    wgt = valid.astype(jnp.float32)
    pix_col = jax.lax.broadcasted_iota(jnp.int32, (Hp, Wp), 1).reshape(-1)

    counts = jnp.zeros((L,), jnp.float32).at[idx].add(wgt)
    colsum = jnp.zeros((L,), jnp.float32).at[idx].add(wgt * pix_col.astype(jnp.float32))
    keep = counts >= MIN_CLUSTER
    mean_col = jnp.where(keep, colsum / jnp.maximum(counts, 1.0), jnp.inf)
    order = jnp.argsort(mean_col)                          # kept clusters first
    rank = jnp.zeros((L,), jnp.int32).at[order].set(jnp.arange(L, dtype=jnp.int32))
    chan_of_label = jnp.where(jnp.logical_and(keep, rank < NUM_CHANNELS), rank, -1)

    # per-pixel output channel over the padded grid (-1 = not in any kept cluster)
    chan_pix = jnp.where(valid, chan_of_label[idx], -1).astype(jnp.int32)  # (HWp,)

    # ---- one-hot write: lane-chunked grid, lane-dense (26, chunk) blocks ------
    rows_per_step = 8
    for r in (64, 32, 16, 8):                              # Hp is a multiple of 8
        if Hp % r == 0:
            rows_per_step = r
            break
    chunk = rows_per_step * Wp                             # multiple of 128 lanes
    n_steps = HWp // chunk
    chan2d = chan_pix.reshape(1, HWp)
    out_flat = pl.pallas_call(
        _onehot_kernel,
        out_shape=jax.ShapeDtypeStruct((NUM_CHANNELS, HWp), jnp.uint8),
        grid=(n_steps,),
        in_specs=[pl.BlockSpec((1, chunk), lambda i: (0, i))],
        out_specs=pl.BlockSpec((NUM_CHANNELS, chunk), lambda i: (0, i)),
        compiler_params=pltpu.CompilerParams(
            dimension_semantics=("parallel",)),
    )(chan2d)
    return out_flat.reshape(NUM_CHANNELS, Hp, Wp)[:, :H, :W]
    # TODO(synk): sklearn's visit-order-dependent border-point tie-breaking and
    # raw cluster-id numbering are not bit-reproducible; only the final one-hot
    # output semantics are reproduced.


if __name__ == "__main__":
    H, W = 32, 32
    key = jax.random.PRNGKey(0)
    k1, k2, k3 = jax.random.split(key, 3)

    # two dense blobs (>= 30 px each) + sparse isolated noise points
    mask = jnp.zeros((H, W), jnp.float32)
    mask = mask.at[4:12, 3:10].set(0.5 + 0.5 * jax.random.uniform(k1, (8, 7)))
    mask = mask.at[18:26, 18:27].set(0.5 + 0.5 * jax.random.uniform(k2, (8, 9)))
    noise = (jax.random.uniform(k3, (H, W)) > 0.99).astype(jnp.float32) * 0.5
    mask = jnp.maximum(mask, noise)

    out = jax.jit(dbscan_cluster)(mask)
    out = jax.block_until_ready(out)

    assert out.shape == (NUM_CHANNELS, H, W) and out.dtype == jnp.uint8
    ch_sums = out.astype(jnp.int32).reshape(NUM_CHANNELS, -1).sum(axis=1)
    # left blob (smaller mean column) -> channel 0, right blob -> channel 1
    assert int(ch_sums[0]) >= MIN_CLUSTER and int(ch_sums[1]) >= MIN_CLUSTER
    assert int(ch_sums[2:].sum()) == 0
    print("KERNEL_OK")
</pallas_src>

<mosaic_0001>
module attributes {stable_mosaic.version = 11 : i64} {
  func.func private @main(%arg0: i32) attributes {dimension_semantics = [#tpu.dimension_semantics<core_parallel>], iteration_bounds = array<i64: 2>, tpu.core_type = #tpu.core_type<sc_scalar_subcore>, window_params = []} {
    return
  }
}

module attributes {stable_mosaic.version = 11 : i64} {
  func.func private @main(%arg0: i32) attributes {dimension_semantics = [#tpu.dimension_semantics<core_parallel>], iteration_bounds = array<i64: 2>, tpu.core_type = #tpu.core_type<sc_scalar_subcore>, window_params = []} {
    return
  }
}

module attributes {stable_mosaic.version = 11 : i64} {
  func.func @_dbscan_label_kernel(%arg0: i32, %arg1: memref<32x32xi8, #tpu.memory_space<vmem>>, %arg2: memref<40x128xi32, #tpu.memory_space<vmem>>, %arg3: memref<40x128xi32, #tpu.memory_space<vmem>>) attributes {dimension_semantics = [#tpu.dimension_semantics<arbitrary>], iteration_bounds = array<i64: 1>, scalar_prefetch = 0 : i64, scratch_operands = 1 : i64, tpu.core_type = #tpu.core_type<tc>, window_params = [{pipeline_mode = #tpu.pipeline_mode<synchronous>, transform_indices = @transform_0, window_bounds = array<i64: 32, 32>}, {pipeline_mode = #tpu.pipeline_mode<synchronous>, transform_indices = @transform_1, window_bounds = array<i64: 40, 128>}]} {
    %c0_i32 = arith.constant 0 : i32
    %0 = vector.broadcast %c0_i32 : i32 to vector<40x128xi32>
    %c0 = arith.constant 0 : index
    %c0_0 = arith.constant 0 : index
    %1 = vector.load %arg3[%c0, %c0_0] : memref<40x128xi32, #tpu.memory_space<vmem>>, vector<40x128xi32>
    tpu.vector_store %arg3[%c0, %c0_0], %0 {strides = array<i32>} : memref<40x128xi32, #tpu.memory_space<vmem>>, vector<40x128xi32>,
    %c0_1 = arith.constant 0 : index
    %c0_2 = arith.constant 0 : index
    %2 = vector.load %arg1[%c0_1, %c0_2] : memref<32x32xi8, #tpu.memory_space<vmem>>, vector<32x32xi8>
    %3 = arith.extsi %2 : vector<32x32xi8> to vector<32x32xi32>
    %c0_3 = arith.constant 0 : index
    %c0_4 = arith.constant 0 : index
    %4 = vector.load %arg3[%c0_3, %c0_4] : memref<40x128xi32, #tpu.memory_space<vmem>>, vector<32x32xi32>
    tpu.vector_store %arg3[%c0_3, %c0_4], %3 {strides = array<i32>} : memref<40x128xi32, #tpu.memory_space<vmem>>, vector<32x32xi32>,
    %c0_5 = arith.constant 0 : index
    %c0_6 = arith.constant 0 : index
    %5 = vector.load %arg3[%c0_5, %c0_6] : memref<40x128xi32, #tpu.memory_space<vmem>>, vector<40x128xi32>
    %c0_i32_7 = arith.constant 0 : i32
    %6 = vector.broadcast %c0_i32_7 : i32 to vector<40x128xi32>
    %7 = arith.cmpi sgt, %5, %6 : vector<40x128xi32>
    %8 = vector.extract_strided_slice %5 {offsets = [39, 0], sizes = [1, 128], strides = [1, 1]} : vector<40x128xi32> to vector<1x128xi32>
    %9 = vector.extract_strided_slice %5 {offsets = [0, 0], sizes = [39, 128], strides = [1, 1]} : vector<40x128xi32> to vector<39x128xi32>
    %10 = tpu.concatenate %8, %9 in 0 : vector<1x128xi32>, vector<39x128xi32> -> vector<40x128xi32>
    %11 = arith.addi %5, %10 : vector<40x128xi32>
    %12 = vector.extract_strided_slice %5 {offsets = [1, 0], sizes = [39, 128], strides = [1, 1]} : vector<40x128xi32> to vector<39x128xi32>
    %13 = vector.extract_strided_slice %5 {offsets = [0, 0], sizes = [1, 128], strides = [1, 1]} : vector<40x128xi32> to vector<1x128xi32>
    %14 = tpu.concatenate %12, %13 in 0 : vector<39x128xi32>, vector<1x128xi32> -> vector<40x128xi32>
    %15 = arith.addi %11, %14 : vector<40x128xi32>
    %16 = vector.extract_strided_slice %15 {offsets = [0, 127], sizes = [40, 1], strides = [1, 1]} : vector<40x128xi32> to vector<40x1xi32>
    %17 = vector.extract_strided_slice %15 {offsets = [0, 0], sizes = [40, 127], strides = [1, 1]} : vector<40x128xi32> to vector<40x127xi32>
    %18 = tpu.concatenate %16, %17 in 1 : vector<40x1xi32>, vector<40x127xi32> -> vector<40x128xi32>
    %19 = arith.addi %15, %18 : vector<40x128xi32>
    %20 = vector.extract_strided_slice %15 {offsets = [0, 1], sizes = [40, 127], strides = [1, 1]} : vector<40x128xi32> to vector<40x127xi32>
    %21 = vector.extract_strided_slice %15 {offsets = [0, 0], sizes = [40, 1], strides = [1, 1]} : vector<40x128xi32> to vector<40x1xi32>
    %22 = tpu.concatenate %20, %21 in 1 : vector<40x127xi32>, vector<40x1xi32> -> vector<40x128xi32>
    %23 = arith.addi %19, %22 : vector<40x128xi32>
    %c4_i32 = arith.constant 4 : i32
    %24 = vector.broadcast %c4_i32 : i32 to vector<40x128xi32>
    %25 = arith.cmpi sge, %23, %24 : vector<40x128xi32>
    %26 = arith.andi %7, %25 : vector<40x128xi1>
    %27 = tpu.iota {dimensions = array<i32: 0>} : vector<40x128xi32>
    %28 = tpu.iota {dimensions = array<i32: 1>} : vector<40x128xi32>
    %c128_i32 = arith.constant 128 : i32
    %29 = vector.broadcast %c128_i32 : i32 to vector<40x128xi32>
    %30 = arith.muli %27, %29 : vector<40x128xi32>
    %31 = arith.addi %30, %28 : vector<40x128xi32>
    %c1073741823_i32 = arith.constant 1073741823 : i32
    %32 = vector.broadcast %c1073741823_i32 : i32 to vector<40x128xi32>
    %33 = arith.select %26, %31, %32 : vector<40x128xi1>, vector<40x128xi32>
    %34 = vector.extract_strided_slice %33 {offsets = [39, 0], sizes = [1, 128], strides = [1, 1]} : vector<40x128xi32> to vector<1x128xi32>
    %35 = vector.extract_strided_slice %33 {offsets = [0, 0], sizes = [39, 128], strides = [1, 1]} : vector<40x128xi32> to vector<39x128xi32>
    %36 = tpu.concatenate %34, %35 in 0 : vector<1x128xi32>, vector<39x128xi32> -> vector<40x128xi32>
    %37 = vector.extract_strided_slice %33 {offsets = [1, 0], sizes = [39, 128], strides = [1, 1]} : vector<40x128xi32> to vector<39x128xi32>
    %38 = vector.extract_strided_slice %33 {offsets = [0, 0], sizes = [1, 128], strides = [1, 1]} : vector<40x128xi32> to vector<1x128xi32>
    %39 = tpu.concatenate %37, %38 in 0 : vector<39x128xi32>, vector<1x128xi32> -> vector<40x128xi32>
    %40 = arith.minsi %36, %39 : vector<40x128xi32>
    %41 = arith.minsi %33, %40 : vector<40x128xi32>
    %42 = vector.extract_strided_slice %41 {offsets = [0, 127], sizes = [40, 1], strides = [1, 1]} : vector<40x128xi32> to vector<40x1xi32>
    %43 = vector.extract_strided_slice %41 {offsets = [0, 0], sizes = [40, 127], strides = [1, 1]} : vector<40x128xi32> to vector<40x127xi32>
    %44 = tpu.concatenate %42, %43 in 1 : vector<40x1xi32>, vector<40x127xi32> -> vector<40x128xi32>
    %45 = vector.extract_strided_slice %41 {offsets = [0, 1], sizes = [40, 127], strides = [1, 1]} : vector<40x128xi32> to vector<40x127xi32>
    %46 = vector.extract_strided_slice %41 {offsets = [0, 0], sizes = [40, 1], strides = [1, 1]} : vector<40x128xi32> to vector<40x1xi32>
    %47 = tpu.concatenate %45, %46 in 1 : vector<40x127xi32>, vector<40x1xi32> -> vector<40x128xi32>
    %48 = arith.minsi %44, %47 : vector<40x128xi32>
    %49 = arith.minsi %41, %48 : vector<40x128xi32>
    %c1073741823_i32_8 = arith.constant 1073741823 : i32
    %50 = vector.broadcast %c1073741823_i32_8 : i32 to vector<40x128xi32>
    %51 = arith.select %26, %49, %50 : vector<40x128xi1>, vector<40x128xi32>
    %52 = vector.extract_strided_slice %51 {offsets = [39, 0], sizes = [1, 128], strides = [1, 1]} : vector<40x128xi32> to vector<1x128xi32>
    %53 = vector.extract_strided_slice %51 {offsets = [0, 0], sizes = [39, 128], strides = [1, 1]} : vector<40x128xi32> to vector<39x128xi32>
    %54 = tpu.concatenate %52, %53 in 0 : vector<1x128xi32>, vector<39x128xi32> -> vector<40x128xi32>
    %55 = vector.extract_strided_slice %51 {offsets = [1, 0], sizes = [39, 128], strides = [1, 1]} : vector<40x128xi32> to vector<39x128xi32>
    %56 = vector.extract_strided_slice %51 {offsets = [0, 0], sizes = [1, 128], strides = [1, 1]} : vector<40x128xi32> to vector<1x128xi32>
    %57 = tpu.concatenate %55, %56 in 0 : vector<39x128xi32>, vector<1x128xi32> -> vector<40x128xi32>
    %58 = arith.minsi %54, %57 : vector<40x128xi32>
    %59 = arith.minsi %51, %58 : vector<40x128xi32>
    %60 = vector.extract_strided_slice %59 {offsets = [0, 127], sizes = [40, 1], strides = [1, 1]} : vector<40x128xi32> to vector<40x1xi32>
    %61 = vector.extract_strided_slice %59 {offsets = [0, 0], sizes = [40, 127], strides = [1, 1]} : vector<40x128xi32> to vector<40x127xi32>
    %62 = tpu.concatenate %60, %61 in 1 : vector<40x1xi32>, vector<40x127xi32> -> vector<40x128xi32>
    %63 = vector.extract_strided_slice %59 {offsets = [0, 1], sizes = [40, 127], strides = [1, 1]} : vector<40x128xi32> to vector<40x127xi32>
    %64 = vector.extract_strided_slice %59 {offsets = [0, 0], sizes = [40, 1], strides = [1, 1]} : vector<40x128xi32> to vector<40x1xi32>
    %65 = tpu.concatenate %63, %64 in 1 : vector<40x127xi32>, vector<40x1xi32> -> vector<40x128xi32>
    %66 = arith.minsi %62, %65 : vector<40x128xi32>
    %67 = arith.minsi %59, %66 : vector<40x128xi32>
    %c1073741823_i32_9 = arith.constant 1073741823 : i32
    %68 = vector.broadcast %c1073741823_i32_9 : i32 to vector<40x128xi32>
    %69 = arith.select %26, %67, %68 : vector<40x128xi1>, vector<40x128xi32>
    %70 = vector.extract_strided_slice %69 {offsets = [39, 0], sizes = [1, 128], strides = [1, 1]} : vector<40x128xi32> to vector<1x128xi32>
    %71 = vector.extract_strided_slice %69 {offsets = [0, 0], sizes = [39, 128], strides = [1, 1]} : vector<40x128xi32> to vector<39x128xi32>
    %72 = tpu.concatenate %70, %71 in 0 : vector<1x128xi32>, vector<39x128xi32> -> vector<40x128xi32>
    %73 = vector.extract_strided_slice %69 {offsets = [1, 0], sizes = [39, 128], strides = [1, 1]} : vector<40x128xi32> to vector<39x128xi32>
    %74 = vector.extract_strided_slice %69 {offsets = [0, 0], sizes = [1, 128], strides = [1, 1]} : vector<40x128xi32> to vector<1x128xi32>
    %75 = tpu.concatenate %73, %74 in 0 : vector<39x128xi32>, vector<1x128xi32> -> vector<40x128xi32>
    %76 = arith.minsi %72, %75 : vector<40x128xi32>
    %77 = arith.minsi %69, %76 : vector<40x128xi32>
    %78 = vector.extract_strided_slice %77 {offsets = [0, 127], sizes = [40, 1], strides = [1, 1]} : vector<40x128xi32> to vector<40x1xi32>
    %79 = vector.extract_strided_slice %77 {offsets = [0, 0], sizes = [40, 127], strides = [1, 1]} : vector<40x128xi32> to vector<40x127xi32>
    %80 = tpu.concatenate %78, %79 in 1 : vector<40x1xi32>, vector<40x127xi32> -> vector<40x128xi32>
    %81 = vector.extract_strided_slice %77 {offsets = [0, 1], sizes = [40, 127], strides = [1, 1]} : vector<40x128xi32> to vector<40x127xi32>
    %82 = vector.extract_strided_slice %77 {offsets = [0, 0], sizes = [40, 1], strides = [1, 1]} : vector<40x128xi32> to vector<40x1xi32>
    %83 = tpu.concatenate %81, %82 in 1 : vector<40x127xi32>, vector<40x1xi32> -> vector<40x128xi32>
    %84 = arith.minsi %80, %83 : vector<40x128xi32>
    %85 = arith.minsi %77, %84 : vector<40x128xi32>
    %c1073741823_i32_10 = arith.constant 1073741823 : i32
    %86 = vector.broadcast %c1073741823_i32_10 : i32 to vector<40x128xi32>
    %87 = arith.select %26, %85, %86 : vector<40x128xi1>, vector<40x128xi32>
    %88 = vector.extract_strided_slice %87 {offsets = [39, 0], sizes = [1, 128], strides = [1, 1]} : vector<40x128xi32> to vector<1x128xi32>
    %89 = vector.extract_strided_slice %87 {offsets = [0, 0], sizes = [39, 128], strides = [1, 1]} : vector<40x128xi32> to vector<39x128xi32>
    %90 = tpu.concatenate %88, %89 in 0 : vector<1x128xi32>, vector<39x128xi32> -> vector<40x128xi32>
    %91 = vector.extract_strided_slice %87 {offsets = [1, 0], sizes = [39, 128], strides = [1, 1]} : vector<40x128xi32> to vector<39x128xi32>
    %92 = vector.extract_strided_slice %87 {offsets = [0, 0], sizes = [1, 128], strides = [1, 1]} : vector<40x128xi32> to vector<1x128xi32>
    %93 = tpu.concatenate %91, %92 in 0 : vector<39x128xi32>, vector<1x128xi32> -> vector<40x128xi32>
    %94 = arith.minsi %90, %93 : vector<40x128xi32>
    %95 = arith.minsi %87, %94 : vector<40x128xi32>
    %96 = vector.extract_strided_slice %95 {offsets = [0, 127], sizes = [40, 1], strides = [1, 1]} : vector<40x128xi32> to vector<40x1xi32>
    %97 = vector.extract_strided_slice %95 {offsets = [0, 0], sizes = [40, 127], strides = [1, 1]} : vector<40x128xi32> to vector<40x127xi32>
    %98 = tpu.concatenate %96, %97 in 1 : vector<40x1xi32>, vector<40x127xi32> -> vector<40x128xi32>
    %99 = vector.extract_strided_slice %95 {offsets = [0, 1], sizes = [40, 127], strides = [1, 1]} : vector<40x128xi32> to vector<40x127xi32>
    %100 = vector.extract_strided_slice %95 {offsets = [0, 0], sizes = [40, 1], strides = [1, 1]} : vector<40x128xi32> to vector<40x1xi32>
    %101 = tpu.concatenate %99, %100 in 1 : vector<40x127xi32>, vector<40x1xi32> -> vector<40x128xi32>
    %102 = arith.minsi %98, %101 : vector<40x128xi32>
    %103 = arith.minsi %95, %102 : vector<40x128xi32>
    %c1073741823_i32_11 = arith.constant 1073741823 : i32
    %104 = vector.broadcast %c1073741823_i32_11 : i32 to vector<40x128xi32>
    %105 = arith.select %26, %103, %104 : vector<40x128xi1>, vector<40x128xi32>
    %106 = vector.extract_strided_slice %105 {offsets = [39, 0], sizes = [1, 128], strides = [1, 1]} : vector<40x128xi32> to vector<1x128xi32>
    %107 = vector.extract_strided_slice %105 {offsets = [0, 0], sizes = [39, 128], strides = [1, 1]} : vector<40x128xi32> to vector<39x128xi32>
    %108 = tpu.concatenate %106, %107 in 0 : vector<1x128xi32>, vector<39x128xi32> -> vector<40x128xi32>
    %109 = vector.extract_strided_slice %105 {offsets = [1, 0], sizes = [39, 128], strides = [1, 1]} : vector<40x128xi32> to vector<39x128xi32>
    %110 = vector.extract_strided_slice %105 {offsets = [0, 0], sizes = [1, 128], strides = [1, 1]} : vector<40x128xi32> to vector<1x128xi32>
    %111 = tpu.concatenate %109, %110 in 0 : vector<39x128xi32>, vector<1x128xi32> -> vector<40x128xi32>
    %112 = arith.minsi %108, %111 : vector<40x128xi32>
    %113 = arith.minsi %105, %112 : vector<40x128xi32>
    %114 = vector.extract_strided_slice %113 {offsets = [0, 127], sizes = [40, 1], strides = [1, 1]} : vector<40x128xi32> to vector<40x1xi32>
    %115 = vector.extract_strided_slice %113 {offsets = [0, 0], sizes = [40, 127], strides = [1, 1]} : vector<40x128xi32> to vector<40x127xi32>
    %116 = tpu.concatenate %114, %115 in 1 : vector<40x1xi32>, vector<40x127xi32> -> vector<40x128xi32>
    %117 = vector.extract_strided_slice %113 {offsets = [0, 1], sizes = [40, 127], strides = [1, 1]} : vector<40x128xi32> to vector<40x127xi32>
    %118 = vector.extract_strided_slice %113 {offsets = [0, 0], sizes = [40, 1], strides = [1, 1]} : vector<40x128xi32> to vector<40x1xi32>
    %119 = tpu.concatenate %117, %118 in 1 : vector<40x127xi32>, vector<40x1xi32> -> vector<40x128xi32>
    %120 = arith.minsi %116, %119 : vector<40x128xi32>
    %121 = arith.minsi %113, %120 : vector<40x128xi32>
    %c1073741823_i32_12 = arith.constant 1073741823 : i32
    %122 = vector.broadcast %c1073741823_i32_12 : i32 to vector<40x128xi32>
    %123 = arith.select %26, %121, %122 : vector<40x128xi1>, vector<40x128xi32>
    %124 = vector.extract_strided_slice %123 {offsets = [39, 0], sizes = [1, 128], strides = [1, 1]} : vector<40x128xi32> to vector<1x128xi32>
    %125 = vector.extract_strided_slice %123 {offsets = [0, 0], sizes = [39, 128], strides = [1, 1]} : vector<40x128xi32> to vector<39x128xi32>
    %126 = tpu.concatenate %124, %125 in 0 : vector<1x128xi32>, vector<39x128xi32> -> vector<40x128xi32>
    %127 = vector.extract_strided_slice %123 {offsets = [1, 0], sizes = [39, 128], strides = [1, 1]} : vector<40x128xi32> to vector<39x128xi32>
    %128 = vector.extract_strided_slice %123 {offsets = [0, 0], sizes = [1, 128], strides = [1, 1]} : vector<40x128xi32> to vector<1x128xi32>
    %129 = tpu.concatenate %127, %128 in 0 : vector<39x128xi32>, vector<1x128xi32> -> vector<40x128xi32>
    %130 = arith.minsi %126, %129 : vector<40x128xi32>
    %131 = arith.minsi %123, %130 : vector<40x128xi32>
    %132 = vector.extract_strided_slice %131 {offsets = [0, 127], sizes = [40, 1], strides = [1, 1]} : vector<40x128xi32> to vector<40x1xi32>
    %133 = vector.extract_strided_slice %131 {offsets = [0, 0], sizes = [40, 127], strides = [1, 1]} : vector<40x128xi32> to vector<40x127xi32>
    %134 = tpu.concatenate %132, %133 in 1 : vector<40x1xi32>, vector<40x127xi32> -> vector<40x128xi32>
    %135 = vector.extract_strided_slice %131 {offsets = [0, 1], sizes = [40, 127], strides = [1, 1]} : vector<40x128xi32> to vector<40x127xi32>
    %136 = vector.extract_strided_slice %131 {offsets = [0, 0], sizes = [40, 1], strides = [1, 1]} : vector<40x128xi32> to vector<40x1xi32>
    %137 = tpu.concatenate %135, %136 in 1 : vector<40x127xi32>, vector<40x1xi32> -> vector<40x128xi32>
    %138 = arith.minsi %134, %137 : vector<40x128xi32>
    %139 = arith.minsi %131, %138 : vector<40x128xi32>
    %c1073741823_i32_13 = arith.constant 1073741823 : i32
    %140 = vector.broadcast %c1073741823_i32_13 : i32 to vector<40x128xi32>
    %141 = arith.select %26, %139, %140 : vector<40x128xi1>, vector<40x128xi32>
    %142 = vector.extract_strided_slice %141 {offsets = [39, 0], sizes = [1, 128], strides = [1, 1]} : vector<40x128xi32> to vector<1x128xi32>
    %143 = vector.extract_strided_slice %141 {offsets = [0, 0], sizes = [39, 128], strides = [1, 1]} : vector<40x128xi32> to vector<39x128xi32>
    %144 = tpu.concatenate %142, %143 in 0 : vector<1x128xi32>, vector<39x128xi32> -> vector<40x128xi32>
    %145 = vector.extract_strided_slice %141 {offsets = [1, 0], sizes = [39, 128], strides = [1, 1]} : vector<40x128xi32> to vector<39x128xi32>
    %146 = vector.extract_strided_slice %141 {offsets = [0, 0], sizes = [1, 128], strides = [1, 1]} : vector<40x128xi32> to vector<1x128xi32>
    %147 = tpu.concatenate %145, %146 in 0 : vector<39x128xi32>, vector<1x128xi32> -> vector<40x128xi32>
    %148 = arith.minsi %144, %147 : vector<40x128xi32>
    %149 = arith.minsi %141, %148 : vector<40x128xi32>
    %150 = vector.extract_strided_slice %149 {offsets = [0, 127], sizes = [40, 1], strides = [1, 1]} : vector<40x128xi32> to vector<40x1xi32>
    %151 = vector.extract_strided_slice %149 {offsets = [0, 0], sizes = [40, 127], strides = [1, 1]} : vector<40x128xi32> to vector<40x127xi32>
    %152 = tpu.concatenate %150, %151 in 1 : vector<40x1xi32>, vector<40x127xi32> -> vector<40x128xi32>
    %153 = vector.extract_strided_slice %149 {offsets = [0, 1], sizes = [40, 127], strides = [1, 1]} : vector<40x128xi32> to vector<40x127xi32>
    %154 = vector.extract_strided_slice %149 {offsets = [0, 0], sizes = [40, 1], strides = [1, 1]} : vector<40x128xi32> to vector<40x1xi32>
    %155 = tpu.concatenate %153, %154 in 1 : vector<40x127xi32>, vector<40x1xi32> -> vector<40x128xi32>
    %156 = arith.minsi %152, %155 : vector<40x128xi32>
    %157 = arith.minsi %149, %156 : vector<40x128xi32>
    %c1073741823_i32_14 = arith.constant 1073741823 : i32
    %158 = vector.broadcast %c1073741823_i32_14 : i32 to vector<40x128xi32>
    %159 = arith.select %26, %157, %158 : vector<40x128xi1>, vector<40x128xi32>
    %160 = vector.extract_strided_slice %159 {offsets = [39, 0], sizes = [1, 128], strides = [1, 1]} : vector<40x128xi32> to vector<1x128xi32>
    %161 = vector.extract_strided_slice %159 {offsets = [0, 0], sizes = [39, 128], strides = [1, 1]} : vector<40x128xi32> to vector<39x128xi32>
    %162 = tpu.concatenate %160, %161 in 0 : vector<1x128xi32>, vector<39x128xi32> -> vector<40x128xi32>
    %163 = vector.extract_strided_slice %159 {offsets = [1, 0], sizes = [39, 128], strides = [1, 1]} : vector<40x128xi32> to vector<39x128xi32>
    %164 = vector.extract_strided_slice %159 {offsets = [0, 0], sizes = [1, 128], strides = [1, 1]} : vector<40x128xi32> to vector<1x128xi32>
    %165 = tpu.concatenate %163, %164 in 0 : vector<39x128xi32>, vector<1x128xi32> -> vector<40x128xi32>
    %166 = arith.minsi %162, %165 : vector<40x128xi32>
    %167 = arith.minsi %159, %166 : vector<40x128xi32>
    %168 = vector.extract_strided_slice %167 {offsets = [0, 127], sizes = [40, 1], strides = [1, 1]} : vector<40x128xi32> to vector<40x1xi32>
    %169 = vector.extract_strided_slice %167 {offsets = [0, 0], sizes = [40, 127], strides = [1, 1]} : vector<40x128xi32> to vector<40x127xi32>
    %170 = tpu.concatenate %168, %169 in 1 : vector<40x1xi32>, vector<40x127xi32> -> vector<40x128xi32>
    %171 = vector.extract_strided_slice %167 {offsets = [0, 1], sizes = [40, 127], strides = [1, 1]} : vector<40x128xi32> to vector<40x127xi32>
    %172 = vector.extract_strided_slice %167 {offsets = [0, 0], sizes = [40, 1], strides = [1, 1]} : vector<40x128xi32> to vector<40x1xi32>
    %173 = tpu.concatenate %171, %172 in 1 : vector<40x127xi32>, vector<40x1xi32> -> vector<40x128xi32>
    %174 = arith.minsi %170, %173 : vector<40x128xi32>
    %175 = arith.minsi %167, %174 : vector<40x128xi32>
    %c1073741823_i32_15 = arith.constant 1073741823 : i32
    %176 = vector.broadcast %c1073741823_i32_15 : i32 to vector<40x128xi32>
    %177 = arith.select %26, %175, %176 : vector<40x128xi1>, vector<40x128xi32>
    %178 = arith.cmpi ne, %177, %33 : vector<40x128xi32>
    %c1_i32 = arith.constant 1 : i32
    %c0_i32_16 = arith.constant 0 : i32
    %179 = vector.broadcast %c1_i32 : i32 to vector<40x128xi32>
    %180 = vector.broadcast %c0_i32_16 : i32 to vector<40x128xi32>
    %181 = arith.select %178, %179, %180 : vector<40x128xi1>, vector<40x128xi32>
    %182 = vector.shape_cast %181 : vector<40x128xi32> to vector<1x40x128xi32>
    %cst = arith.constant dense<0> : vector<1xi32>
    %183 = vector.multi_reduction <add>, %182, %cst [1, 2] : vector<1x40x128xi32> to vector<1xi32>
    %184 = vector.shape_cast %183 : vector<1xi32> to vector<1x1x1xi32>
    %185 = vector.extract %184[0, 0, 0] : i32 from vector<1x1x1xi32>
    %c0_i32_17 = arith.constant 0 : i32
    %186 = arith.cmpi sgt, %185, %c0_i32_17 : i32
    %187:2 = scf.while (%arg4 = %177, %arg5 = %186) : (vector<40x128xi32>, i1) -> (vector<40x128xi32>, i1) {
      scf.condition(%arg5) %arg4, %arg5 : vector<40x128xi32>, i1
    } do {
    ^bb0(%arg4: vector<40x128xi32>, %arg5: i1):
      %213 = vector.extract_strided_slice %arg4 {offsets = [39, 0], sizes = [1, 128], strides = [1, 1]} : vector<40x128xi32> to vector<1x128xi32>
      %214 = vector.extract_strided_slice %arg4 {offsets = [0, 0], sizes = [39, 128], strides = [1, 1]} : vector<40x128xi32> to vector<39x128xi32>
      %215 = tpu.concatenate %213, %214 in 0 : vector<1x128xi32>, vector<39x128xi32> -> vector<40x128xi32>
      %216 = vector.extract_strided_slice %arg4 {offsets = [1, 0], sizes = [39, 128], strides = [1, 1]} : vector<40x128xi32> to vector<39x128xi32>
      %217 = vector.extract_strided_slice %arg4 {offsets = [0, 0], sizes = [1, 128], strides = [1, 1]} : vector<40x128xi32> to vector<1x128xi32>
      %218 = tpu.concatenate %216, %217 in 0 : vector<39x128xi32>, vector<1x128xi32> -> vector<40x128xi32>
      %219 = arith.minsi %215, %218 : vector<40x128xi32>
      %220 = arith.minsi %arg4, %219 : vector<40x128xi32>
      %221 = vector.extract_strided_slice %220 {offsets = [0, 127], sizes = [40, 1], strides = [1, 1]} : vector<40x128xi32> to vector<40x1xi32>
      %222 = vector.extract_strided_slice %220 {offsets = [0, 0], sizes = [40, 127], strides = [1, 1]} : vector<40x128xi32> to vector<40x127xi32>
      %223 = tpu.concatenate %221, %222 in 1 : vector<40x1xi32>, vector<40x127xi32> -> vector<40x128xi32>
      %224 = vector.extract_strided_slice %220 {offsets = [0, 1], sizes = [40, 127], strides = [1, 1]} : vector<40x128xi32> to vector<40x127xi32>
      %225 = vector.extract_strided_slice %220 {offsets = [0, 0], sizes = [40, 1], strides = [1, 1]} : vector<40x128xi32> to vector<40x1xi32>
      %226 = tpu.concatenate %224, %225 in 1 : vector<40x127xi32>, vector<40x1xi32> -> vector<40x128xi32>
      %227 = arith.minsi %223, %226 : vector<40x128xi32>
      %228 = arith.minsi %220, %227 : vector<40x128xi32>
      %c1073741823_i32_22 = arith.constant 1073741823 : i32
      %229 = vector.broadcast %c1073741823_i32_22 : i32 to vector<40x128xi32>
      %230 = arith.select %26, %228, %229 : vector<40x128xi1>, vector<40x128xi32>
      %231 = vector.extract_strided_slice %230 {offsets = [39, 0], sizes = [1, 128], strides = [1, 1]} : vector<40x128xi32> to vector<1x128xi32>
      %232 = vector.extract_strided_slice %230 {offsets = [0, 0], sizes = [39, 128], strides = [1, 1]} : vector<40x128xi32> to vector<39x128xi32>
      %233 = tpu.concatenate %231, %232 in 0 : vector<1x128xi32>, vector<39x128xi32> -> vector<40x128xi32>
      %234 = vector.extract_strided_slice %230 {offsets = [1, 0], sizes = [39, 128], strides = [1, 1]} : vector<40x128xi32> to vector<39x128xi32>
      %235 = vector.extract_strided_slice %230 {offsets = [0, 0], sizes = [1, 128], strides = [1, 1]} : vector<40x128xi32> to vector<1x128xi32>
      %236 = tpu.concatenate %234, %235 in 0 : vector<39x128xi32>, vector<1x128xi32> -> vector<40x128xi32>
      %237 = arith.minsi %233, %236 : vector<40x128xi32>
      %238 = arith.minsi %230, %237 : vector<40x128xi32>
      %239 = vector.extract_strided_slice %238 {offsets = [0, 127], sizes = [40, 1], strides = [1, 1]} : vector<40x128xi32> to vector<40x1xi32>
      %240 = vector.extract_strided_slice %238 {offsets = [0, 0], sizes = [40, 127], strides = [1, 1]} : vector<40x128xi32> to vector<40x127xi32>
      %241 = tpu.concatenate %239, %240 in 1 : vector<40x1xi32>, vector<40x127xi32> -> vector<40x128xi32>
      %242 = vector.extract_strided_slice %238 {offsets = [0, 1], sizes = [40, 127], strides = [1, 1]} : vector<40x128xi32> to vector<40x127xi32>
      %243 = vector.extract_strided_slice %238 {offsets = [0, 0], sizes = [40, 1], strides = [1, 1]} : vector<40x128xi32> to vector<40x1xi32>
      %244 = tpu.concatenate %242, %243 in 1 : vector<40x127xi32>, vector<40x1xi32> -> vector<40x128xi32>
      %245 = arith.minsi %241, %244 : vector<40x128xi32>
      %246 = arith.minsi %238, %245 : vector<40x128xi32>
      %c1073741823_i32_23 = arith.constant 1073741823 : i32
      %247 = vector.broadcast %c1073741823_i32_23 : i32 to vector<40x128xi32>
      %248 = arith.select %26, %246, %247 : vector<40x128xi1>, vector<40x128xi32>
      %249 = vector.extract_strided_slice %248 {offsets = [39, 0], sizes = [1, 128], strides = [1, 1]} : vector<40x128xi32> to vector<1x128xi32>
      %250 = vector.extract_strided_slice %248 {offsets = [0, 0], sizes = [39, 128], strides = [1, 1]} : vector<40x128xi32> to vector<39x128xi32>
      %251 = tpu.concatenate %249, %250 in 0 : vector<1x128xi32>, vector<39x128xi32> -> vector<40x128xi32>
      %252 = vector.extract_strided_slice %248 {offsets = [1, 0], sizes = [39, 128], strides = [1, 1]} : vector<40x128xi32> to vector<39x128xi32>
      %253 = vector.extract_strided_slice %248 {offsets = [0, 0], sizes = [1, 128], strides = [1, 1]} : vector<40x128xi32> to vector<1x128xi32>
      %254 = tpu.concatenate %252, %253 in 0 : vector<39x128xi32>, vector<1x128xi32> -> vector<40x128xi32>
      %255 = arith.minsi %251, %254 : vector<40x128xi32>
      %256 = arith.minsi %248, %255 : vector<40x128xi32>
      %257 = vector.extract_strided_slice %256 {offsets = [0, 127], sizes = [40, 1], strides = [1, 1]} : vector<40x128xi32> to vector<40x1xi32>
      %258 = vector.extract_strided_slice %256 {offsets = [0, 0], sizes = [40, 127], strides = [1, 1]} : vector<40x128xi32> to vector<40x127xi32>
      %259 = tpu.concatenate %257, %258 in 1 : vector<40x1xi32>, vector<40x127xi32> -> vector<40x128xi32>
      %260 = vector.extract_strided_slice %256 {offsets = [0, 1], sizes = [40, 127], strides = [1, 1]} : vector<40x128xi32> to vector<40x127xi32>
      %261 = vector.extract_strided_slice %256 {offsets = [0, 0], sizes = [40, 1], strides = [1, 1]} : vector<40x128xi32> to vector<40x1xi32>
      %262 = tpu.concatenate %260, %261 in 1 : vector<40x127xi32>, vector<40x1xi32> -> vector<40x128xi32>
      %263 = arith.minsi %259, %262 : vector<40x128xi32>
      %264 = arith.minsi %256, %263 : vector<40x128xi32>
      %c1073741823_i32_24 = arith.constant 1073741823 : i32
      %265 = vector.broadcast %c1073741823_i32_24 : i32 to vector<40x128xi32>
      %266 = arith.select %26, %264, %265 : vector<40x128xi1>, vector<40x128xi32>
      %267 = vector.extract_strided_slice %266 {offsets = [39, 0], sizes = [1, 128], strides = [1, 1]} : vector<40x128xi32> to vector<1x128xi32>
      %268 = vector.extract_strided_slice %266 {offsets = [0, 0], sizes = [39, 128], strides = [1, 1]} : vector<40x128xi32> to vector<39x128xi32>
      %269 = tpu.concatenate %267, %268 in 0 : vector<1x128xi32>, vector<39x128xi32> -> vector<40x128xi32>
      %270 = vector.extract_strided_slice %266 {offsets = [1, 0], sizes = [39, 128], strides = [1, 1]} : vector<40x128xi32> to vector<39x128xi32>
      %271 = vector.extract_strided_slice %266 {offsets = [0, 0], sizes = [1, 128], strides = [1, 1]} : vector<40x128xi32> to vector<1x128xi32>
      %272 = tpu.concatenate %270, %271 in 0 : vector<39x128xi32>, vector<1x128xi32> -> vector<40x128xi32>
      %273 = arith.minsi %269, %272 : vector<40x128xi32>
      %274 = arith.minsi %266, %273 : vector<40x128xi32>
      %275 = vector.extract_strided_slice %274 {offsets = [0, 127], sizes = [40, 1], strides = [1, 1]} : vector<40x128xi32> to vector<40x1xi32>
      %276 = vector.extract_strided_slice %274 {offsets = [0, 0], sizes = [40, 127], strides = [1, 1]} : vector<40x128xi32> to vector<40x127xi32>
      %277 = tpu.concatenate %275, %276 in 1 : vector<40x1xi32>, vector<40x127xi32> -> vector<40x128xi32>
      %278 = vector.extract_strided_slice %274 {offsets = [0, 1], sizes = [40, 127], strides = [1, 1]} : vector<40x128xi32> to vector<40x127xi32>
      %279 = vector.extract_strided_slice %274 {offsets = [0, 0], sizes = [40, 1], strides = [1, 1]} : vector<40x128xi32> to vector<40x1xi32>
      %280 = tpu.concatenate %278, %279 in 1 : vector<40x127xi32>, vector<40x1xi32> -> vector<40x128xi32>
      %281 = arith.minsi %277, %280 : vector<40x128xi32>
      %282 = arith.minsi %274, %281 : vector<40x128xi32>
      %c1073741823_i32_25 = arith.constant 1073741823 : i32
      %283 = vector.broadcast %c1073741823_i32_25 : i32 to vector<40x128xi32>
      %284 = arith.select %26, %282, %283 : vector<40x128xi1>, vector<40x128xi32>
      %285 = vector.extract_strided_slice %284 {offsets = [39, 0], sizes = [1, 128], strides = [1, 1]} : vector<40x128xi32> to vector<1x128xi32>
      %286 = vector.extract_strided_slice %284 {offsets = [0, 0], sizes = [39, 128], strides = [1, 1]} : vector<40x128xi32> to vector<39x128xi32>
      %287 = tpu.concatenate %285, %286 in 0 : vector<1x128xi32>, vector<39x128xi32> -> vector<40x128xi32>
      %288 = vector.extract_strided_slice %284 {offsets = [1, 0], sizes = [39, 128], strides = [1, 1]} : vector<40x128xi32> to vector<39x128xi32>
      %289 = vector.extract_strided_slice %284 {offsets = [0, 0], sizes = [1, 128], strides = [1, 1]} : vector<40x128xi32> to vector<1x128xi32>
      %290 = tpu.concatenate %288, %289 in 0 : vector<39x128xi32>, vector<1x128xi32> -> vector<40x128xi32>
      %291 = arith.minsi %287, %290 : vector<40x128xi32>
      %292 = arith.minsi %284, %291 : vector<40x128xi32>
      %293 = vector.extract_strided_slice %292 {offsets = [0, 127], sizes = [40, 1], strides = [1, 1]} : vector<40x128xi32> to vector<40x1xi32>
      %294 = vector.extract_strided_slice %292 {offsets = [0, 0], sizes = [40, 127], strides = [1, 1]} : vector<40x128xi32> to vector<40x127xi32>
      %295 = tpu.concatenate %293, %294 in 1 : vector<40x1xi32>, vector<40x127xi32> -> vector<40x128xi32>
      %296 = vector.extract_strided_slice %292 {offsets = [0, 1], sizes = [40, 127], strides = [1, 1]} : vector<40x128xi32> to vector<40x127xi32>
      %297 = vector.extract_strided_slice %292 {offsets = [0, 0], sizes = [40, 1], strides = [1, 1]} : vector<40x128xi32> to vector<40x1xi32>
      %298 = tpu.concatenate %296, %297 in 1 : vector<40x127xi32>, vector<40x1xi32> -> vector<40x128xi32>
      %299 = arith.minsi %295, %298 : vector<40x128xi32>
      %300 = arith.minsi %292, %299 : vector<40x128xi32>
      %c1073741823_i32_26 = arith.constant 1073741823 : i32
      %301 = vector.broadcast %c1073741823_i32_26 : i32 to vector<40x128xi32>
      %302 = arith.select %26, %300, %301 : vector<40x128xi1>, vector<40x128xi32>
      %303 = vector.extract_strided_slice %302 {offsets = [39, 0], sizes = [1, 128], strides = [1, 1]} : vector<40x128xi32> to vector<1x128xi32>
      %304 = vector.extract_strided_slice %302 {offsets = [0, 0], sizes = [39, 128], strides = [1, 1]} : vector<40x128xi32> to vector<39x128xi32>
      %305 = tpu.concatenate %303, %304 in 0 : vector<1x128xi32>, vector<39x128xi32> -> vector<40x128xi32>
      %306 = vector.extract_strided_slice %302 {offsets = [1, 0], sizes = [39, 128], strides = [1, 1]} : vector<40x128xi32> to vector<39x128xi32>
      %307 = vector.extract_strided_slice %302 {offsets = [0, 0], sizes = [1, 128], strides = [1, 1]} : vector<40x128xi32> to vector<1x128xi32>
      %308 = tpu.concatenate %306, %307 in 0 : vector<39x128xi32>, vector<1x128xi32> -> vector<40x128xi32>
      %309 = arith.minsi %305, %308 : vector<40x128xi32>
      %310 = arith.minsi %302, %309 : vector<40x128xi32>
      %311 = vector.extract_strided_slice %310 {offsets = [0, 127], sizes = [40, 1], strides = [1, 1]} : vector<40x128xi32> to vector<40x1xi32>
      %312 = vector.extract_strided_slice %310 {offsets = [0, 0], sizes = [40, 127], strides = [1, 1]} : vector<40x128xi32> to vector<40x127xi32>
      %313 = tpu.concatenate %311, %312 in 1 : vector<40x1xi32>, vector<40x127xi32> -> vector<40x128xi32>
      %314 = vector.extract_strided_slice %310 {offsets = [0, 1], sizes = [40, 127], strides = [1, 1]} : vector<40x128xi32> to vector<40x127xi32>
      %315 = vector.extract_strided_slice %310 {offsets = [0, 0], sizes = [40, 1], strides = [1, 1]} : vector<40x128xi32> to vector<40x1xi32>
      %316 = tpu.concatenate %314, %315 in 1 : vector<40x127xi32>, vector<40x1xi32> -> vector<40x128xi32>
      %317 = arith.minsi %313, %316 : vector<40x128xi32>
      %318 = arith.minsi %310, %317 : vector<40x128xi32>
      %c1073741823_i32_27 = arith.constant 1073741823 : i32
      %319 = vector.broadcast %c1073741823_i32_27 : i32 to vector<40x128xi32>
      %320 = arith.select %26, %318, %319 : vector<40x128xi1>, vector<40x128xi32>
      %321 = vector.extract_strided_slice %320 {offsets = [39, 0], sizes = [1, 128], strides = [1, 1]} : vector<40x128xi32> to vector<1x128xi32>
      %322 = vector.extract_strided_slice %320 {offsets = [0, 0], sizes = [39, 128], strides = [1, 1]} : vector<40x128xi32> to vector<39x128xi32>
      %323 = tpu.concatenate %321, %322 in 0 : vector<1x128xi32>, vector<39x128xi32> -> vector<40x128xi32>
      %324 = vector.extract_strided_slice %320 {offsets = [1, 0], sizes = [39, 128], strides = [1, 1]} : vector<40x128xi32> to vector<39x128xi32>
      %325 = vector.extract_strided_slice %320 {offsets = [0, 0], sizes = [1, 128], strides = [1, 1]} : vector<40x128xi32> to vector<1x128xi32>
      %326 = tpu.concatenate %324, %325 in 0 : vector<39x128xi32>, vector<1x128xi32> -> vector<40x128xi32>
      %327 = arith.minsi %323, %326 : vector<40x128xi32>
      %328 = arith.minsi %320, %327 : vector<40x128xi32>
      %329 = vector.extract_strided_slice %328 {offsets = [0, 127], sizes = [40, 1], strides = [1, 1]} : vector<40x128xi32> to vector<40x1xi32>
      %330 = vector.extract_strided_slice %328 {offsets = [0, 0], sizes = [40, 127], strides = [1, 1]} : vector<40x128xi32> to vector<40x127xi32>
      %331 = tpu.concatenate %329, %330 in 1 : vector<40x1xi32>, vector<40x127xi32> -> vector<40x128xi32>
      %332 = vector.extract_strided_slice %328 {offsets = [0, 1], sizes = [40, 127], strides = [1, 1]} : vector<40x128xi32> to vector<40x127xi32>
      %333 = vector.extract_strided_slice %328 {offsets = [0, 0], sizes = [40, 1], strides = [1, 1]} : vector<40x128xi32> to vector<40x1xi32>
      %334 = tpu.concatenate %332, %333 in 1 : vector<40x127xi32>, vector<40x1xi32> -> vector<40x128xi32>
      %335 = arith.minsi %331, %334 : vector<40x128xi32>
      %336 = arith.minsi %328, %335 : vector<40x128xi32>
      %c1073741823_i32_28 = arith.constant 1073741823 : i32
      %337 = vector.broadcast %c1073741823_i32_28 : i32 to vector<40x128xi32>
      %338 = arith.select %26, %336, %337 : vector<40x128xi1>, vector<40x128xi32>
      %339 = vector.extract_strided_slice %338 {offsets = [39, 0], sizes = [1, 128], strides = [1, 1]} : vector<40x128xi32> to vector<1x128xi32>
      %340 = vector.extract_strided_slice %338 {offsets = [0, 0], sizes = [39, 128], strides = [1, 1]} : vector<40x128xi32> to vector<39x128xi32>
      %341 = tpu.concatenate %339, %340 in 0 : vector<1x128xi32>, vector<39x128xi32> -> vector<40x128xi32>
      %342 = vector.extract_strided_slice %338 {offsets = [1, 0], sizes = [39, 128], strides = [1, 1]} : vector<40x128xi32> to vector<39x128xi32>
      %343 = vector.extract_strided_slice %338 {offsets = [0, 0], sizes = [1, 128], strides = [1, 1]} : vector<40x128xi32> to vector<1x128xi32>
      %344 = tpu.concatenate %342, %343 in 0 : vector<39x128xi32>, vector<1x128xi32> -> vector<40x128xi32>
      %345 = arith.minsi %341, %344 : vector<40x128xi32>
      %346 = arith.minsi %338, %345 : vector<40x128xi32>
      %347 = vector.extract_strided_slice %346 {offsets = [0, 127], sizes = [40, 1], strides = [1, 1]} : vector<40x128xi32> to vector<40x1xi32>
      %348 = vector.extract_strided_slice %346 {offsets = [0, 0], sizes = [40, 127], strides = [1, 1]} : vector<40x128xi32> to vector<40x127xi32>
      %349 = tpu.concatenate %347, %348 in 1 : vector<40x1xi32>, vector<40x127xi32> -> vector<40x128xi32>
      %350 = vector.extract_strided_slice %346 {offsets = [0, 1], sizes = [40, 127], strides = [1, 1]} : vector<40x128xi32> to vector<40x127xi32>
      %351 = vector.extract_strided_slice %346 {offsets = [0, 0], sizes = [40, 1], strides = [1, 1]} : vector<40x128xi32> to vector<40x1xi32>
      %352 = tpu.concatenate %350, %351 in 1 : vector<40x127xi32>, vector<40x1xi32> -> vector<40x128xi32>
      %353 = arith.minsi %349, %352 : vector<40x128xi32>
      %354 = arith.minsi %346, %353 : vector<40x128xi32>
      %c1073741823_i32_29 = arith.constant 1073741823 : i32
      %355 = vector.broadcast %c1073741823_i32_29 : i32 to vector<40x128xi32>
      %356 = arith.select %26, %354, %355 : vector<40x128xi1>, vector<40x128xi32>
      %357 = arith.cmpi ne, %356, %arg4 : vector<40x128xi32>
      %c1_i32_30 = arith.constant 1 : i32
      %c0_i32_31 = arith.constant 0 : i32
      %358 = vector.broadcast %c1_i32_30 : i32 to vector<40x128xi32>
      %359 = vector.broadcast %c0_i32_31 : i32 to vector<40x128xi32>
      %360 = arith.select %357, %358, %359 : vector<40x128xi1>, vector<40x128xi32>
      %361 = vector.shape_cast %360 : vector<40x128xi32> to vector<1x40x128xi32>
      %cst_32 = arith.constant dense<0> : vector<1xi32>
      %362 = vector.multi_reduction <add>, %361, %cst_32 [1, 2] : vector<1x40x128xi32> to vector<1xi32>
      %363 = vector.shape_cast %362 : vector<1xi32> to vector<1x1x1xi32>
      %364 = vector.extract %363[0, 0, 0] : i32 from vector<1x1x1xi32>
      %c0_i32_33 = arith.constant 0 : i32
      %365 = arith.cmpi sgt, %364, %c0_i32_33 : i32
      scf.yield %356, %365 : vector<40x128xi32>, i1
    }
    %188 = vector.extract_strided_slice %187#0 {offsets = [39, 0], sizes = [1, 128], strides = [1, 1]} : vector<40x128xi32> to vector<1x128xi32>
    %189 = vector.extract_strided_slice %187#0 {offsets = [0, 0], sizes = [39, 128], strides = [1, 1]} : vector<40x128xi32> to vector<39x128xi32>
    %190 = tpu.concatenate %188, %189 in 0 : vector<1x128xi32>, vector<39x128xi32> -> vector<40x128xi32>
    %191 = vector.extract_strided_slice %187#0 {offsets = [1, 0], sizes = [39, 128], strides = [1, 1]} : vector<40x128xi32> to vector<39x128xi32>
    %192 = vector.extract_strided_slice %187#0 {offsets = [0, 0], sizes = [1, 128], strides = [1, 1]} : vector<40x128xi32> to vector<1x128xi32>
    %193 = tpu.concatenate %191, %192 in 0 : vector<39x128xi32>, vector<1x128xi32> -> vector<40x128xi32>
    %194 = arith.minsi %190, %193 : vector<40x128xi32>
    %195 = arith.minsi %187#0, %194 : vector<40x128xi32>
    %196 = vector.extract_strided_slice %195 {offsets = [0, 127], sizes = [40, 1], strides = [1, 1]} : vector<40x128xi32> to vector<40x1xi32>
    %197 = vector.extract_strided_slice %195 {offsets = [0, 0], sizes = [40, 127], strides = [1, 1]} : vector<40x128xi32> to vector<40x127xi32>
    %198 = tpu.concatenate %196, %197 in 1 : vector<40x1xi32>, vector<40x127xi32> -> vector<40x128xi32>
    %199 = vector.extract_strided_slice %195 {offsets = [0, 1], sizes = [40, 127], strides = [1, 1]} : vector<40x128xi32> to vector<40x127xi32>
    %200 = vector.extract_strided_slice %195 {offsets = [0, 0], sizes = [40, 1], strides = [1, 1]} : vector<40x128xi32> to vector<40x1xi32>
    %201 = tpu.concatenate %199, %200 in 1 : vector<40x127xi32>, vector<40x1xi32> -> vector<40x128xi32>
    %202 = arith.minsi %198, %201 : vector<40x128xi32>
    %203 = arith.minsi %195, %202 : vector<40x128xi32>
    %cst_18 = arith.constant dense<true> : vector<40x128xi1>
    %204 = arith.xori %26, %cst_18 : vector<40x128xi1>
    %205 = arith.andi %7, %204 : vector<40x128xi1>
    %c1073741823_i32_19 = arith.constant 1073741823 : i32
    %206 = vector.broadcast %c1073741823_i32_19 : i32 to vector<40x128xi32>
    %207 = arith.cmpi slt, %203, %206 : vector<40x128xi32>
    %208 = arith.andi %205, %207 : vector<40x128xi1>
    %c-1_i32 = arith.constant -1 : i32
    %209 = vector.broadcast %c-1_i32 : i32 to vector<40x128xi32>
    %210 = arith.select %208, %203, %209 : vector<40x128xi1>, vector<40x128xi32>
    %211 = arith.select %26, %187#0, %210 : vector<40x128xi1>, vector<40x128xi32>
    %c0_20 = arith.constant 0 : index
    %c0_21 = arith.constant 0 : index
    %212 = vector.load %arg2[%c0_20, %c0_21] : memref<40x128xi32, #tpu.memory_space<vmem>>, vector<40x128xi32>
    tpu.vector_store %arg2[%c0_20, %c0_21], %211 {strides = array<i32>} : memref<40x128xi32, #tpu.memory_space<vmem>>, vector<40x128xi32>,
    return
  }
  func.func @transform_0(%arg0: i32) -> (i32, i32) {
    %c0_i32 = arith.constant 0 : i32
    %c0_i32_0 = arith.constant 0 : i32
    %c0_i32_1 = arith.constant 0 : i32
    return %c0_i32, %c0_i32_0 : i32, i32
  }
  func.func @transform_1(%arg0: i32) -> (i32, i32) {
    %c0_i32 = arith.constant 0 : i32
    %c0_i32_0 = arith.constant 0 : i32
    %c0_i32_1 = arith.constant 0 : i32
    return %c0_i32, %c0_i32_0 : i32, i32
  }
}

module attributes {stable_mosaic.version = 11 : i64} {
  func.func @_onehot_kernel(%arg0: i32, %arg1: memref<1x1024xi32, #tpu.memory_space<vmem>>, %arg2: memref<26x1024xi8, #tpu.memory_space<vmem>>) attributes {dimension_semantics = [#tpu.dimension_semantics<parallel>], iteration_bounds = array<i64: 5>, scalar_prefetch = 0 : i64, scratch_operands = 0 : i64, tpu.core_type = #tpu.core_type<tc>, window_params = [{transform_indices = @transform_0, window_bounds = array<i64: 1, 1024>}, {transform_indices = @transform_1, window_bounds = array<i64: 26, 1024>}]} {
    %c0 = arith.constant 0 : index
    %c0_0 = arith.constant 0 : index
    %0 = vector.load %arg1[%c0, %c0_0] : memref<1x1024xi32, #tpu.memory_space<vmem>>, vector<1x1024xi32>
    %1 = tpu.iota {dimensions = array<i32: 0>} : vector<26x1024xi32>
    %2 = vector.broadcast %0 : vector<1x1024xi32> to vector<26x1024xi32>
    %3 = arith.cmpi eq, %2, %1 : vector<26x1024xi32>
    %4 = arith.extui %3 : vector<26x1024xi1> to vector<26x1024xi8>
    %c0_1 = arith.constant 0 : index
    %c0_2 = arith.constant 0 : index
    %5 = vector.load %arg2[%c0_1, %c0_2] : memref<26x1024xi8, #tpu.memory_space<vmem>>, vector<26x1024xi8>
    tpu.vector_store %arg2[%c0_1, %c0_2], %4 {strides = array<i32>} : memref<26x1024xi8, #tpu.memory_space<vmem>>, vector<26x1024xi8>,
    return
  }
  func.func @transform_0(%arg0: i32) -> (i32, i32) {
    %c0_i32 = arith.constant 0 : i32
    %c0_i32_0 = arith.constant 0 : i32
    return %c0_i32, %arg0 : i32, i32
  }
  func.func @transform_1(%arg0: i32) -> (i32, i32) {
    %c0_i32 = arith.constant 0 : i32
    %c0_i32_0 = arith.constant 0 : i32
    return %c0_i32, %arg0 : i32, i32
  }
}

</mosaic_0001>

<llo_original>
// kernel: dbscan_cluster.2
$region0: #{dbscan_cluster.2}
  #allocation0 [shape = 'u32[]', space=smem, size = 0x4, offset = 0x4, fixed_abs, tag = 'smem constant byte address 0x4 - core index']
  #allocation1 [shape = 'u32[144,128]{1,0:T(1,128)}', space=vmem, size = 0x12000, scoped, tag = 'internal scratch']
  #allocation2 [shape = 's32[40,128]{1,0:T(8,128)}', space=vmem, size = 0x5000, scoped, tag = 'scratch operand']
  %s0 = inlined_call_operand.vmem [shape: s8[32,32], index: 0, kind: input, shape index: {}]
  %s1 = inlined_call_operand.vmem [shape: s32[40,128], index: 1, kind: output, shape index: {}]
  %s2 = sld [smem:[#allocation0]]
  $region21: #{dbscan_cluster.2} parent=0
    _
  %s4 = ssub.s32 1, %s2
  %s5 = scalar_select 0, %s4, %s2
  // Predicated region
  $region2: #{dbscan_cluster.2} parent=0 // pred_check
    _
  $region3: #{dbscan_cluster.2} parent=0 // pred_check_branch
    %7 = sbr.rel (0) target = $region5
  $region4: #{dbscan_cluster.2} parent=0 // pred_region
    _
  $region5: #{dbscan_cluster.2} parent=0 // pred_fallthru
    _
  %8 = vst [vmem:[#allocation2] sm:$0xff] 0
  %9 = vst [vmem:[#allocation2 + $0x8] sm:$0xff] 0
  %10 = vst [vmem:[#allocation2 + $0x10] sm:$0xff] 0
  %11 = vst [vmem:[#allocation2 + $0x18] sm:$0xff] 0
  %12 = vst [vmem:[#allocation2 + $0x20] sm:$0xff] 0
  %v13 = vld [vmem:[%s0] sm:$0xff]
  %v14 = vunpack.c.0.s8 %v13
  %v15 = vunpack.c.1.s8 %v13
  %v16 = vunpack.c.2.s8 %v13
  %v17 = vunpack.c.3.s8 %v13
  %vm18 = vcmask 261120
  %19 = vst.msk [vmem:[#allocation2] sm:$0xff] %vm18, %v14
  %20 = vst.msk [vmem:[#allocation2 + $0x8] sm:$0xff] %vm18, %v15
  %21 = vst.msk [vmem:[#allocation2 + $0x10] sm:$0xff] %vm18, %v16
  %22 = vst.msk [vmem:[#allocation2 + $0x18] sm:$0xff] %vm18, %v17
  %v23 = vld [vmem:[#allocation2] sm:$0xff]
  %v24 = vld [vmem:[#allocation2 + $0x8] sm:$0xff]
  %v25 = vld [vmem:[#allocation2 + $0x10] sm:$0xff]
  %v26 = vld [vmem:[#allocation2 + $0x18] sm:$0xff]
  %v27 = vld [vmem:[#allocation2 + $0x20] sm:$0xff]
  %vm28 = vcmp.gt.s32.totalorder %v23, 0
  %vm29 = vcmp.gt.s32.totalorder %v24, 0
  %vm30 = vcmp.gt.s32.totalorder %v25, 0
  %vm31 = vcmp.gt.s32.totalorder %v26, 0
  %vm32 = vcmp.gt.s32.totalorder %v27, 0
  %v33 = vrot.slane %v27, 7
  %vm34 = vcmask 1040384
  %v35 = vrot.slane %v23, 7
  %v36 = vrot.slane %v24, 7
  %v37 = vsel %vm34, %v35, %v36
  %v38 = vrot.slane %v25, 7
  %v39 = vsel %vm34, %v36, %v38
  %v40 = vrot.slane %v26, 7
  %v41 = vsel %vm34, %v38, %v40
  %v42 = vsel %vm34, %v40, %v33
  %v43 = vsel %vm34, %v33, %v35
  %v44 = vadd.s32 %v23, %v43
  %v45 = vadd.s32 %v24, %v37
  %v46 = vadd.s32 %v25, %v39
  %v47 = vadd.s32 %v26, %v41
  %v48 = vadd.s32 %v27, %v42
  %vm49 = vcmask 1046528
  %v50 = vrot.slane %v23, 1
  %v51 = vrot.slane %v24, 1
  %v52 = vsel %vm49, %v50, %v51
  %v53 = vrot.slane %v25, 1
  %v54 = vsel %vm49, %v51, %v53
  %v55 = vrot.slane %v26, 1
  %v56 = vsel %vm49, %v53, %v55
  %v57 = vrot.slane %v27, 1
  %v58 = vsel %vm49, %v55, %v57
  %v59 = vsel %vm49, %v57, %v50
  %v60 = vadd.s32 %v44, %v52
  %v61 = vadd.s32 %v45, %v54
  %v62 = vadd.s32 %v46, %v56
  %v63 = vadd.s32 %v47, %v58
  %v64 = vadd.s32 %v48, %v59
  %65 = vrot.lane.b32.xlu0 %v60, 1
  %v66 = vpop.permute.xlu0 %65
  %67 = vrot.lane.b32.xlu0 %v61, 1
  %v68 = vpop.permute.xlu0 %67
  %69 = vrot.lane.b32.xlu0 %v62, 1
  %v70 = vpop.permute.xlu0 %69
  %71 = vrot.lane.b32.xlu0 %v63, 1
  %v72 = vpop.permute.xlu0 %71
  %73 = vrot.lane.b32.xlu0 %v64, 1
  %v74 = vpop.permute.xlu0 %73
  %v75 = vadd.s32 %v60, %v66
  %v76 = vadd.s32 %v61, %v68
  %v77 = vadd.s32 %v62, %v70
  %v78 = vadd.s32 %v63, %v72
  %v79 = vadd.s32 %v64, %v74
  %80 = vrot.lane.b32.xlu0 %v60, 127
  %v81 = vpop.permute.xlu0 %80
  %82 = vrot.lane.b32.xlu0 %v61, 127
  %v83 = vpop.permute.xlu0 %82
  %84 = vrot.lane.b32.xlu0 %v62, 127
  %v85 = vpop.permute.xlu0 %84
  %86 = vrot.lane.b32.xlu0 %v63, 127
  %v87 = vpop.permute.xlu0 %86
  %88 = vrot.lane.b32.xlu0 %v64, 127
  %v89 = vpop.permute.xlu0 %88
  %v90 = vadd.s32 %v75, %v81
  %v91 = vadd.s32 %v76, %v83
  %v92 = vadd.s32 %v77, %v85
  %v93 = vadd.s32 %v78, %v87
  %v94 = vadd.s32 %v79, %v89
  %vm95 = vcmp.ge.s32.totalorder %v90, 4
  %vm96 = vcmp.ge.s32.totalorder %v91, 4
  %vm97 = vcmp.ge.s32.totalorder %v92, 4
  %vm98 = vcmp.ge.s32.totalorder %v93, 4
  %vm99 = vcmp.ge.s32.totalorder %v94, 4
  %vm100 = vmand %vm28, %vm95
  %vm101 = vmand %vm29, %vm96
  %vm102 = vmand %vm30, %vm97
  %vm103 = vmand %vm31, %vm98
  %vm104 = vmand %vm32, %vm99
  %v105 = vlaneseq
  %v106 = vshrl.u32 %v105, 7
  %v107 = vadd.s32 %v106, 8
  %v108 = vadd.s32 %v106, 16
  %v109 = vadd.s32 %v106, 24
  %v110 = vadd.s32 %v106, 32
  %v111 = vlaneseq
  %v112 = vand.u32 %v111, 127
  %v113 = vmul.u32 %v106, 128
  %v114 = vmul.u32 %v107, 128
  %v115 = vmul.u32 %v108, 128
  %v116 = vmul.u32 %v109, 128
  %v117 = vmul.u32 %v110, 128
  %v118 = vadd.s32 %v113, %v112
  %v119 = vadd.s32 %v114, %v112
  %v120 = vadd.s32 %v115, %v112
  %v121 = vadd.s32 %v116, %v112
  %v122 = vadd.s32 %v117, %v112
  %v123 = vsel %vm100, %v118, 1073741823
  %v124 = vsel %vm101, %v119, 1073741823
  %v125 = vsel %vm102, %v120, 1073741823
  %v126 = vsel %vm103, %v121, 1073741823
  %v127 = vsel %vm104, %v122, 1073741823
  %v128 = vrot.slane %v127, 7
  %v129 = vrot.slane %v123, 7
  %v130 = vrot.slane %v124, 7
  %v131 = vsel %vm34, %v129, %v130
  %v132 = vrot.slane %v125, 7
  %v133 = vsel %vm34, %v130, %v132
  %v134 = vrot.slane %v126, 7
  %v135 = vsel %vm34, %v132, %v134
  %v136 = vsel %vm34, %v134, %v128
  %v137 = vsel %vm34, %v128, %v129
  %v138 = vrot.slane %v123, 1
  %v139 = vrot.slane %v124, 1
  %v140 = vsel %vm49, %v138, %v139
  %v141 = vrot.slane %v125, 1
  %v142 = vsel %vm49, %v139, %v141
  %v143 = vrot.slane %v126, 1
  %v144 = vsel %vm49, %v141, %v143
  %v145 = vrot.slane %v127, 1
  %v146 = vsel %vm49, %v143, %v145
  %v147 = vsel %vm49, %v145, %v138
  %vm148 = vcmp.lt.s32.totalorder %v137, %v140
  %v149 = vsel %vm148, %v137, %v140
  %vm150 = vcmp.lt.s32.totalorder %v131, %v142
  %v151 = vsel %vm150, %v131, %v142
  %vm152 = vcmp.lt.s32.totalorder %v133, %v144
  %v153 = vsel %vm152, %v133, %v144
  %vm154 = vcmp.lt.s32.totalorder %v135, %v146
  %v155 = vsel %vm154, %v135, %v146
  %vm156 = vcmp.lt.s32.totalorder %v136, %v147
  %v157 = vsel %vm156, %v136, %v147
  %vm158 = vcmp.lt.s32.totalorder %v123, %v149
  %v159 = vsel %vm158, %v123, %v149
  %vm160 = vcmp.lt.s32.totalorder %v124, %v151
  %v161 = vsel %vm160, %v124, %v151
  %vm162 = vcmp.lt.s32.totalorder %v125, %v153
  %v163 = vsel %vm162, %v125, %v153
  %vm164 = vcmp.lt.s32.totalorder %v126, %v155
  %v165 = vsel %vm164, %v126, %v155
  %vm166 = vcmp.lt.s32.totalorder %v127, %v157
  %v167 = vsel %vm166, %v127, %v157
  %168 = vrot.lane.b32.xlu0 %v159, 1
  %v169 = vpop.permute.xlu0 %168
  %170 = vrot.lane.b32.xlu0 %v161, 1
  %v171 = vpop.permute.xlu0 %170
  %172 = vrot.lane.b32.xlu0 %v163, 1
  %v173 = vpop.permute.xlu0 %172
  %174 = vrot.lane.b32.xlu0 %v165, 1
  %v175 = vpop.permute.xlu0 %174
  %176 = vrot.lane.b32.xlu0 %v167, 1
  %v177 = vpop.permute.xlu0 %176
  %178 = vrot.lane.b32.xlu0 %v159, 127
  %v179 = vpop.permute.xlu0 %178
  %180 = vrot.lane.b32.xlu0 %v161, 127
  %v181 = vpop.permute.xlu0 %180
  %182 = vrot.lane.b32.xlu0 %v163, 127
  %v183 = vpop.permute.xlu0 %182
  %184 = vrot.lane.b32.xlu0 %v165, 127
  %v185 = vpop.permute.xlu0 %184
  %186 = vrot.lane.b32.xlu0 %v167, 127
  %v187 = vpop.permute.xlu0 %186
  %vm188 = vcmp.lt.s32.totalorder %v169, %v179
  %v189 = vsel %vm188, %v169, %v179
  %vm190 = vcmp.lt.s32.totalorder %v171, %v181
  %v191 = vsel %vm190, %v171, %v181
  %vm192 = vcmp.lt.s32.totalorder %v173, %v183
  %v193 = vsel %vm192, %v173, %v183
  %vm194 = vcmp.lt.s32.totalorder %v175, %v185
  %v195 = vsel %vm194, %v175, %v185
  %vm196 = vcmp.lt.s32.totalorder %v177, %v187
  %v197 = vsel %vm196, %v177, %v187
  %vm198 = vcmp.lt.s32.totalorder %v159, %v189
  %v199 = vsel %vm198, %v159, %v189
  %vm200 = vcmp.lt.s32.totalorder %v161, %v191
  %v201 = vsel %vm200, %v161, %v191
  %vm202 = vcmp.lt.s32.totalorder %v163, %v193
  %v203 = vsel %vm202, %v163, %v193
  %vm204 = vcmp.lt.s32.totalorder %v165, %v195
  %v205 = vsel %vm204, %v165, %v195
  %vm206 = vcmp.lt.s32.totalorder %v167, %v197
  %v207 = vsel %vm206, %v167, %v197
  %v208 = vsel %vm100, %v199, 1073741823
  %v209 = vsel %vm101, %v201, 1073741823
  %v210 = vsel %vm102, %v203, 1073741823
  %v211 = vsel %vm103, %v205, 1073741823
  %v212 = vsel %vm104, %v207, 1073741823
  %v213 = vrot.slane %v212, 7
  %v214 = vrot.slane %v208, 7
  %v215 = vrot.slane %v209, 7
  %v216 = vsel %vm34, %v214, %v215
  %v217 = vrot.slane %v210, 7
  %v218 = vsel %vm34, %v215, %v217
  %v219 = vrot.slane %v211, 7
  %v220 = vsel %vm34, %v217, %v219
  %v221 = vsel %vm34, %v219, %v213
  %v222 = vsel %vm34, %v213, %v214
  %v223 = vrot.slane %v208, 1
  %v224 = vrot.slane %v209, 1
  %v225 = vsel %vm49, %v223, %v224
  %v226 = vrot.slane %v210, 1
  %v227 = vsel %vm49, %v224, %v226
  %v228 = vrot.slane %v211, 1
  %v229 = vsel %vm49, %v226, %v228
  %v230 = vrot.slane %v212, 1
  %v231 = vsel %vm49, %v228, %v230
  %v232 = vsel %vm49, %v230, %v223
  %vm233 = vcmp.lt.s32.totalorder %v222, %v225
  %v234 = vsel %vm233, %v222, %v225
  %vm235 = vcmp.lt.s32.totalorder %v216, %v227
  %v236 = vsel %vm235, %v216, %v227
  %vm237 = vcmp.lt.s32.totalorder %v218, %v229
  %v238 = vsel %vm237, %v218, %v229
  %vm239 = vcmp.lt.s32.totalorder %v220, %v231
  %v240 = vsel %vm239, %v220, %v231
  %vm241 = vcmp.lt.s32.totalorder %v221, %v232
  %v242 = vsel %vm241, %v221, %v232
  %vm243 = vcmp.lt.s32.totalorder %v208, %v234
  %v244 = vsel %vm243, %v208, %v234
  %vm245 = vcmp.lt.s32.totalorder %v209, %v236
  %v246 = vsel %vm245, %v209, %v236
  %vm247 = vcmp.lt.s32.totalorder %v210, %v238
  %v248 = vsel %vm247, %v210, %v238
  %vm249 = vcmp.lt.s32.totalorder %v211, %v240
  %v250 = vsel %vm249, %v211, %v240
  %vm251 = vcmp.lt.s32.totalorder %v212, %v242
  %v252 = vsel %vm251, %v212, %v242
  %253 = vrot.lane.b32.xlu0 %v244, 1
  %v254 = vpop.permute.xlu0 %253
  %255 = vrot.lane.b32.xlu0 %v246, 1
  %v256 = vpop.permute.xlu0 %255
  %257 = vrot.lane.b32.xlu0 %v248, 1
  %v258 = vpop.permute.xlu0 %257
  %259 = vrot.lane.b32.xlu0 %v250, 1
  %v260 = vpop.permute.xlu0 %259
  %261 = vrot.lane.b32.xlu0 %v252, 1
  %v262 = vpop.permute.xlu0 %261
  %263 = vrot.lane.b32.xlu0 %v244, 127
  %v264 = vpop.permute.xlu0 %263
  %265 = vrot.lane.b32.xlu0 %v246, 127
  %v266 = vpop.permute.xlu0 %265
  %267 = vrot.lane.b32.xlu0 %v248, 127
  %v268 = vpop.permute.xlu0 %267
  %269 = vrot.lane.b32.xlu0 %v250, 127
  %v270 = vpop.permute.xlu0 %269
  %271 = vrot.lane.b32.xlu0 %v252, 127
  %v272 = vpop.permute.xlu0 %271
  %vm273 = vcmp.lt.s32.totalorder %v254, %v264
  %v274 = vsel %vm273, %v254, %v264
  %vm275 = vcmp.lt.s32.totalorder %v256, %v266
  %v276 = vsel %vm275, %v256, %v266
  %vm277 = vcmp.lt.s32.totalorder %v258, %v268
  %v278 = vsel %vm277, %v258, %v268
  %vm279 = vcmp.lt.s32.totalorder %v260, %v270
  %v280 = vsel %vm279, %v260, %v270
  %vm281 = vcmp.lt.s32.totalorder %v262, %v272
  %v282 = vsel %vm281, %v262, %v272
  %vm283 = vcmp.lt.s32.totalorder %v244, %v274
  %v284 = vsel %vm283, %v244, %v274
  %vm285 = vcmp.lt.s32.totalorder %v246, %v276
  %v286 = vsel %vm285, %v246, %v276
  %vm287 = vcmp.lt.s32.totalorder %v248, %v278
  %v288 = vsel %vm287, %v248, %v278
  %vm289 = vcmp.lt.s32.totalorder %v250, %v280
  %v290 = vsel %vm289, %v250, %v280
  %vm291 = vcmp.lt.s32.totalorder %v252, %v282
  %v292 = vsel %vm291, %v252, %v282
  %v293 = vsel %vm100, %v284, 1073741823
  %v294 = vsel %vm101, %v286, 1073741823
  %v295 = vsel %vm102, %v288, 1073741823
  %v296 = vsel %vm103, %v290, 1073741823
  %v297 = vsel %vm104, %v292, 1073741823
  %v298 = vrot.slane %v297, 7
  %v299 = vrot.slane %v293, 7
  %v300 = vrot.slane %v294, 7
  %v301 = vsel %vm34, %v299, %v300
  %v302 = vrot.slane %v295, 7
  %v303 = vsel %vm34, %v300, %v302
  %v304 = vrot.slane %v296, 7
  %v305 = vsel %vm34, %v302, %v304
  %v306 = vsel %vm34, %v304, %v298
  %v307 = vsel %vm34, %v298, %v299
  %v308 = vrot.slane %v293, 1
  %v309 = vrot.slane %v294, 1
  %v310 = vsel %vm49, %v308, %v309
  %v311 = vrot.slane %v295, 1
  %v312 = vsel %vm49, %v309, %v311
  %v313 = vrot.slane %v296, 1
  %v314 = vsel %vm49, %v311, %v313
  %v315 = vrot.slane %v297, 1
  %v316 = vsel %vm49, %v313, %v315
  %v317 = vsel %vm49, %v315, %v308
  %vm318 = vcmp.lt.s32.totalorder %v307, %v310
  %v319 = vsel %vm318, %v307, %v310
  %vm320 = vcmp.lt.s32.totalorder %v301, %v312
  %v321 = vsel %vm320, %v301, %v312
  %vm322 = vcmp.lt.s32.totalorder %v303, %v314
  %v323 = vsel %vm322, %v303, %v314
  %vm324 = vcmp.lt.s32.totalorder %v305, %v316
  %v325 = vsel %vm324, %v305, %v316
  %vm326 = vcmp.lt.s32.totalorder %v306, %v317
  %v327 = vsel %vm326, %v306, %v317
  %vm328 = vcmp.lt.s32.totalorder %v293, %v319
  %v329 = vsel %vm328, %v293, %v319
  %vm330 = vcmp.lt.s32.totalorder %v294, %v321
  %v331 = vsel %vm330, %v294, %v321
  %vm332 = vcmp.lt.s32.totalorder %v295, %v323
  %v333 = vsel %vm332, %v295, %v323
  %vm334 = vcmp.lt.s32.totalorder %v296, %v325
  %v335 = vsel %vm334, %v296, %v325
  %vm336 = vcmp.lt.s32.totalorder %v297, %v327
  %v337 = vsel %vm336, %v297, %v327
  %338 = vrot.lane.b32.xlu0 %v329, 1
  %v339 = vpop.permute.xlu0 %338
  %340 = vrot.lane.b32.xlu0 %v331, 1
  %v341 = vpop.permute.xlu0 %340
  %342 = vrot.lane.b32.xlu0 %v333, 1
  %v343 = vpop.permute.xlu0 %342
  %344 = vrot.lane.b32.xlu0 %v335, 1
  %v345 = vpop.permute.xlu0 %344
  %346 = vrot.lane.b32.xlu0 %v337, 1
  %v347 = vpop.permute.xlu0 %346
  %348 = vrot.lane.b32.xlu0 %v329, 127
  %v349 = vpop.permute.xlu0 %348
  %350 = vrot.lane.b32.xlu0 %v331, 127
  %v351 = vpop.permute.xlu0 %350
  %352 = vrot.lane.b32.xlu0 %v333, 127
  %v353 = vpop.permute.xlu0 %352
  %354 = vrot.lane.b32.xlu0 %v335, 127
  %v355 = vpop.permute.xlu0 %354
  %356 = vrot.lane.b32.xlu0 %v337, 127
  %v357 = vpop.permute.xlu0 %356
  %vm358 = vcmp.lt.s32.totalorder %v339, %v349
  %v359 = vsel %vm358, %v339, %v349
  %vm360 = vcmp.lt.s32.totalorder %v341, %v351
  %v361 = vsel %vm360, %v341, %v351
  %vm362 = vcmp.lt.s32.totalorder %v343, %v353
  %v363 = vsel %vm362, %v343, %v353
  %vm364 = vcmp.lt.s32.totalorder %v345, %v355
  %v365 = vsel %vm364, %v345, %v355
  %vm366 = vcmp.lt.s32.totalorder %v347, %v357
  %v367 = vsel %vm366, %v347, %v357
  %vm368 = vcmp.lt.s32.totalorder %v329, %v359
  %v369 = vsel %vm368, %v329, %v359
  %vm370 = vcmp.lt.s32.totalorder %v331, %v361
  %v371 = vsel %vm370, %v331, %v361
  %vm372 = vcmp.lt.s32.totalorder %v333, %v363
  %v373 = vsel %vm372, %v333, %v363
  %vm374 = vcmp.lt.s32.totalorder %v335, %v365
  %v375 = vsel %vm374, %v335, %v365
  %vm376 = vcmp.lt.s32.totalorder %v337, %v367
  %v377 = vsel %vm376, %v337, %v367
  %v378 = vsel %vm100, %v369, 1073741823
  %v379 = vsel %vm101, %v371, 1073741823
  %v380 = vsel %vm102, %v373, 1073741823
  %v381 = vsel %vm103, %v375, 1073741823
  %v382 = vsel %vm104, %v377, 1073741823
  %v383 = vrot.slane %v382, 7
  %v384 = vrot.slane %v378, 7
  %v385 = vrot.slane %v379, 7
  %v386 = vsel %vm34, %v384, %v385
  %v387 = vrot.slane %v380, 7
  %v388 = vsel %vm34, %v385, %v387
  %v389 = vrot.slane %v381, 7
  %v390 = vsel %vm34, %v387, %v389
  %v391 = vsel %vm34, %v389, %v383
  %v392 = vsel %vm34, %v383, %v384
  %v393 = vrot.slane %v378, 1
  %v394 = vrot.slane %v379, 1
  %v395 = vsel %vm49, %v393, %v394
  %v396 = vrot.slane %v380, 1
  %v397 = vsel %vm49, %v394, %v396
  %v398 = vrot.slane %v381, 1
  %v399 = vsel %vm49, %v396, %v398
  %v400 = vrot.slane %v382, 1
  %v401 = vsel %vm49, %v398, %v400
  %v402 = vsel %vm49, %v400, %v393
  %vm403 = vcmp.lt.s32.totalorder %v392, %v395
  %v404 = vsel %vm403, %v392, %v395
  %vm405 = vcmp.lt.s32.totalorder %v386, %v397
  %v406 = vsel %vm405, %v386, %v397
  %vm407 = vcmp.lt.s32.totalorder %v388, %v399
  %v408 = vsel %vm407, %v388, %v399
  %vm409 = vcmp.lt.s32.totalorder %v390, %v401
  %v410 = vsel %vm409, %v390, %v401
  %vm411 = vcmp.lt.s32.totalorder %v391, %v402
  %v412 = vsel %vm411, %v391, %v402
  %vm413 = vcmp.lt.s32.totalorder %v378, %v404
  %v414 = vsel %vm413, %v378, %v404
  %vm415 = vcmp.lt.s32.totalorder %v379, %v406
  %v416 = vsel %vm415, %v379, %v406
  %vm417 = vcmp.lt.s32.totalorder %v380, %v408
  %v418 = vsel %vm417, %v380, %v408
  %vm419 = vcmp.lt.s32.totalorder %v381, %v410
  %v420 = vsel %vm419, %v381, %v410
  %vm421 = vcmp.lt.s32.totalorder %v382, %v412
  %v422 = vsel %vm421, %v382, %v412
  %423 = vrot.lane.b32.xlu0 %v414, 1
  %v424 = vpop.permute.xlu0 %423
  %425 = vrot.lane.b32.xlu0 %v416, 1
  %v426 = vpop.permute.xlu0 %425
  %427 = vrot.lane.b32.xlu0 %v418, 1
  %v428 = vpop.permute.xlu0 %427
  %429 = vrot.lane.b32.xlu0 %v420, 1
  %v430 = vpop.permute.xlu0 %429
  %431 = vrot.lane.b32.xlu0 %v422, 1
  %v432 = vpop.permute.xlu0 %431
  %433 = vrot.lane.b32.xlu0 %v414, 127
  %v434 = vpop.permute.xlu0 %433
  %435 = vrot.lane.b32.xlu0 %v416, 127
  %v436 = vpop.permute.xlu0 %435
  %437 = vrot.lane.b32.xlu0 %v418, 127
  %v438 = vpop.permute.xlu0 %437
  %439 = vrot.lane.b32.xlu0 %v420, 127
  %v440 = vpop.permute.xlu0 %439
  %441 = vrot.lane.b32.xlu0 %v422, 127
  %v442 = vpop.permute.xlu0 %441
  %vm443 = vcmp.lt.s32.totalorder %v424, %v434
  %v444 = vsel %vm443, %v424, %v434
  %vm445 = vcmp.lt.s32.totalorder %v426, %v436
  %v446 = vsel %vm445, %v426, %v436
  %vm447 = vcmp.lt.s32.totalorder %v428, %v438
  %v448 = vsel %vm447, %v428, %v438
  %vm449 = vcmp.lt.s32.totalorder %v430, %v440
  %v450 = vsel %vm449, %v430, %v440
  %vm451 = vcmp.lt.s32.totalorder %v432, %v442
  %v452 = vsel %vm451, %v432, %v442
  %vm453 = vcmp.lt.s32.totalorder %v414, %v444
  %v454 = vsel %vm453, %v414, %v444
  %vm455 = vcmp.lt.s32.totalorder %v416, %v446
  %v456 = vsel %vm455, %v416, %v446
  %vm457 = vcmp.lt.s32.totalorder %v418, %v448
  %v458 = vsel %vm457, %v418, %v448
  %vm459 = vcmp.lt.s32.totalorder %v420, %v450
  %v460 = vsel %vm459, %v420, %v450
  %vm461 = vcmp.lt.s32.totalorder %v422, %v452
  %v462 = vsel %vm461, %v422, %v452
  %v463 = vsel %vm100, %v454, 1073741823
  %v464 = vsel %vm101, %v456, 1073741823
  %v465 = vsel %vm102, %v458, 1073741823
  %v466 = vsel %vm103, %v460, 1073741823
  %v467 = vsel %vm104, %v462, 1073741823
  %v468 = vrot.slane %v467, 7
  %v469 = vrot.slane %v463, 7
  %v470 = vrot.slane %v464, 7
  %v471 = vsel %vm34, %v469, %v470
  %v472 = vrot.slane %v465, 7
  %v473 = vsel %vm34, %v470, %v472
  %v474 = vrot.slane %v466, 7
  %v475 = vsel %vm34, %v472, %v474
  %v476 = vsel %vm34, %v474, %v468
  %v477 = vsel %vm34, %v468, %v469
  %v478 = vrot.slane %v463, 1
  %v479 = vrot.slane %v464, 1
  %v480 = vsel %vm49, %v478, %v479
  %v481 = vrot.slane %v465, 1
  %v482 = vsel %vm49, %v479, %v481
  %v483 = vrot.slane %v466, 1
  %v484 = vsel %vm49, %v481, %v483
  %v485 = vrot.slane %v467, 1
  %v486 = vsel %vm49, %v483, %v485
  %v487 = vsel %vm49, %v485, %v478
  %vm488 = vcmp.lt.s32.totalorder %v477, %v480
  %v489 = vsel %vm488, %v477, %v480
  %vm490 = vcmp.lt.s32.totalorder %v471, %v482
  %v491 = vsel %vm490, %v471, %v482
  %vm492 = vcmp.lt.s32.totalorder %v473, %v484
  %v493 = vsel %vm492, %v473, %v484
  %vm494 = vcmp.lt.s32.totalorder %v475, %v486
  %v495 = vsel %vm494, %v475, %v486
  %vm496 = vcmp.lt.s32.totalorder %v476, %v487
  %v497 = vsel %vm496, %v476, %v487
  %vm498 = vcmp.lt.s32.totalorder %v463, %v489
  %v499 = vsel %vm498, %v463, %v489
  %vm500 = vcmp.lt.s32.totalorder %v464, %v491
  %v501 = vsel %vm500, %v464, %v491
  %vm502 = vcmp.lt.s32.totalorder %v465, %v493
  %v503 = vsel %vm502, %v465, %v493
  %vm504 = vcmp.lt.s32.totalorder %v466, %v495
  %v505 = vsel %vm504, %v466, %v495
  %vm506 = vcmp.lt.s32.totalorder %v467, %v497
  %v507 = vsel %vm506, %v467, %v497
  %508 = vrot.lane.b32.xlu0 %v499, 1
  %v509 = vpop.permute.xlu0 %508
  %510 = vrot.lane.b32.xlu0 %v501, 1
  %v511 = vpop.permute.xlu0 %510
  %512 = vrot.lane.b32.xlu0 %v503, 1
  %v513 = vpop.permute.xlu0 %512
  %514 = vrot.lane.b32.xlu0 %v505, 1
  %v515 = vpop.permute.xlu0 %514
  %516 = vrot.lane.b32.xlu0 %v507, 1
  %v517 = vpop.permute.xlu0 %516
  %518 = vrot.lane.b32.xlu0 %v499, 127
  %v519 = vpop.permute.xlu0 %518
  %520 = vrot.lane.b32.xlu0 %v501, 127
  %v521 = vpop.permute.xlu0 %520
  %522 = vrot.lane.b32.xlu0 %v503, 127
  %v523 = vpop.permute.xlu0 %522
  %524 = vrot.lane.b32.xlu0 %v505, 127
  %v525 = vpop.permute.xlu0 %524
  %526 = vrot.lane.b32.xlu0 %v507, 127
  %v527 = vpop.permute.xlu0 %526
  %vm528 = vcmp.lt.s32.totalorder %v509, %v519
  %v529 = vsel %vm528, %v509, %v519
  %vm530 = vcmp.lt.s32.totalorder %v511, %v521
  %v531 = vsel %vm530, %v511, %v521
  %vm532 = vcmp.lt.s32.totalorder %v513, %v523
  %v533 = vsel %vm532, %v513, %v523
  %vm534 = vcmp.lt.s32.totalorder %v515, %v525
  %v535 = vsel %vm534, %v515, %v525
  %vm536 = vcmp.lt.s32.totalorder %v517, %v527
  %v537 = vsel %vm536, %v517, %v527
  %vm538 = vcmp.lt.s32.totalorder %v499, %v529
  %v539 = vsel %vm538, %v499, %v529
  %vm540 = vcmp.lt.s32.totalorder %v501, %v531
  %v541 = vsel %vm540, %v501, %v531
  %vm542 = vcmp.lt.s32.totalorder %v503, %v533
  %v543 = vsel %vm542, %v503, %v533
  %vm544 = vcmp.lt.s32.totalorder %v505, %v535
  %v545 = vsel %vm544, %v505, %v535
  %vm546 = vcmp.lt.s32.totalorder %v507, %v537
  %v547 = vsel %vm546, %v507, %v537
  %v548 = vsel %vm100, %v539, 1073741823
  %v549 = vsel %vm101, %v541, 1073741823
  %v550 = vsel %vm102, %v543, 1073741823
  %v551 = vsel %vm103, %v545, 1073741823
  %v552 = vsel %vm104, %v547, 1073741823
  %v553 = vrot.slane %v552, 7
  %v554 = vrot.slane %v548, 7
  %v555 = vrot.slane %v549, 7
  %v556 = vsel %vm34, %v554, %v555
  %v557 = vrot.slane %v550, 7
  %v558 = vsel %vm34, %v555, %v557
  %v559 = vrot.slane %v551, 7
  %v560 = vsel %vm34, %v557, %v559
  %v561 = vsel %vm34, %v559, %v553
  %v562 = vsel %vm34, %v553, %v554
  %v563 = vrot.slane %v548, 1
  %v564 = vrot.slane %v549, 1
  %v565 = vsel %vm49, %v563, %v564
  %v566 = vrot.slane %v550, 1
  %v567 = vsel %vm49, %v564, %v566
  %v568 = vrot.slane %v551, 1
  %v569 = vsel %vm49, %v566, %v568
  %v570 = vrot.slane %v552, 1
  %v571 = vsel %vm49, %v568, %v570
  %v572 = vsel %vm49, %v570, %v563
  %vm573 = vcmp.lt.s32.totalorder %v562, %v565
  %v574 = vsel %vm573, %v562, %v565
  %vm575 = vcmp.lt.s32.totalorder %v556, %v567
  %v576 = vsel %vm575, %v556, %v567
  %vm577 = vcmp.lt.s32.totalorder %v558, %v569
  %v578 = vsel %vm577, %v558, %v569
  %vm579 = vcmp.lt.s32.totalorder %v560, %v571
  %v580 = vsel %vm579, %v560, %v571
  %vm581 = vcmp.lt.s32.totalorder %v561, %v572
  %v582 = vsel %vm581, %v561, %v572
  %vm583 = vcmp.lt.s32.totalorder %v548, %v574
  %v584 = vsel %vm583, %v548, %v574
  %vm585 = vcmp.lt.s32.totalorder %v549, %v576
  %v586 = vsel %vm585, %v549, %v576
  %vm587 = vcmp.lt.s32.totalorder %v550, %v578
  %v588 = vsel %vm587, %v550, %v578
  %vm589 = vcmp.lt.s32.totalorder %v551, %v580
  %v590 = vsel %vm589, %v551, %v580
  %vm591 = vcmp.lt.s32.totalorder %v552, %v582
  %v592 = vsel %vm591, %v552, %v582
  %593 = vrot.lane.b32.xlu0 %v584, 1
  %v594 = vpop.permute.xlu0 %593
  %595 = vrot.lane.b32.xlu0 %v586, 1
  %v596 = vpop.permute.xlu0 %595
  %597 = vrot.lane.b32.xlu0 %v588, 1
  %v598 = vpop.permute.xlu0 %597
  %599 = vrot.lane.b32.xlu0 %v590, 1
  %v600 = vpop.permute.xlu0 %599
  %601 = vrot.lane.b32.xlu0 %v592, 1
  %v602 = vpop.permute.xlu0 %601
  %603 = vrot.lane.b32.xlu0 %v584, 127
  %v604 = vpop.permute.xlu0 %603
  %605 = vrot.lane.b32.xlu0 %v586, 127
  %v606 = vpop.permute.xlu0 %605
  %607 = vrot.lane.b32.xlu0 %v588, 127
  %v608 = vpop.permute.xlu0 %607
  %609 = vrot.lane.b32.xlu0 %v590, 127
  %v610 = vpop.permute.xlu0 %609
  %611 = vrot.lane.b32.xlu0 %v592, 127
  %v612 = vpop.permute.xlu0 %611
  %vm613 = vcmp.lt.s32.totalorder %v594, %v604
  %v614 = vsel %vm613, %v594, %v604
  %vm615 = vcmp.lt.s32.totalorder %v596, %v606
  %v616 = vsel %vm615, %v596, %v606
  %vm617 = vcmp.lt.s32.totalorder %v598, %v608
  %v618 = vsel %vm617, %v598, %v608
  %vm619 = vcmp.lt.s32.totalorder %v600, %v610
  %v620 = vsel %vm619, %v600, %v610
  %vm621 = vcmp.lt.s32.totalorder %v602, %v612
  %v622 = vsel %vm621, %v602, %v612
  %vm623 = vcmp.lt.s32.totalorder %v584, %v614
  %v624 = vsel %vm623, %v584, %v614
  %vm625 = vcmp.lt.s32.totalorder %v586, %v616
  %v626 = vsel %vm625, %v586, %v616
  %vm627 = vcmp.lt.s32.totalorder %v588, %v618
  %v628 = vsel %vm627, %v588, %v618
  %vm629 = vcmp.lt.s32.totalorder %v590, %v620
  %v630 = vsel %vm629, %v590, %v620
  %vm631 = vcmp.lt.s32.totalorder %v592, %v622
  %v632 = vsel %vm631, %v592, %v622
  %v633 = vsel %vm100, %v624, 1073741823
  %v634 = vsel %vm101, %v626, 1073741823
  %v635 = vsel %vm102, %v628, 1073741823
  %v636 = vsel %vm103, %v630, 1073741823
  %v637 = vsel %vm104, %v632, 1073741823
  %v638 = vrot.slane %v637, 7
  %v639 = vrot.slane %v633, 7
  %v640 = vrot.slane %v634, 7
  %v641 = vsel %vm34, %v639, %v640
  %v642 = vrot.slane %v635, 7
  %v643 = vsel %vm34, %v640, %v642
  %v644 = vrot.slane %v636, 7
  %v645 = vsel %vm34, %v642, %v644
  %v646 = vsel %vm34, %v644, %v638
  %v647 = vsel %vm34, %v638, %v639
  %v648 = vrot.slane %v633, 1
  %v649 = vrot.slane %v634, 1
  %v650 = vsel %vm49, %v648, %v649
  %v651 = vrot.slane %v635, 1
  %v652 = vsel %vm49, %v649, %v651
  %v653 = vrot.slane %v636, 1
  %v654 = vsel %vm49, %v651, %v653
  %v655 = vrot.slane %v637, 1
  %v656 = vsel %vm49, %v653, %v655
  %v657 = vsel %vm49, %v655, %v648
  %vm658 = vcmp.lt.s32.totalorder %v647, %v650
  %v659 = vsel %vm658, %v647, %v650
  %vm660 = vcmp.lt.s32.totalorder %v641, %v652
  %v661 = vsel %vm660, %v641, %v652
  %vm662 = vcmp.lt.s32.totalorder %v643, %v654
  %v663 = vsel %vm662, %v643, %v654
  %vm664 = vcmp.lt.s32.totalorder %v645, %v656
  %v665 = vsel %vm664, %v645, %v656
  %vm666 = vcmp.lt.s32.totalorder %v646, %v657
  %v667 = vsel %vm666, %v646, %v657
  %vm668 = vcmp.lt.s32.totalorder %v633, %v659
  %v669 = vsel %vm668, %v633, %v659
  %vm670 = vcmp.lt.s32.totalorder %v634, %v661
  %v671 = vsel %vm670, %v634, %v661
  %vm672 = vcmp.lt.s32.totalorder %v635, %v663
  %v673 = vsel %vm672, %v635, %v663
  %vm674 = vcmp.lt.s32.totalorder %v636, %v665
  %v675 = vsel %vm674, %v636, %v665
  %vm676 = vcmp.lt.s32.totalorder %v637, %v667
  %v677 = vsel %vm676, %v637, %v667
  %678 = vrot.lane.b32.xlu0 %v669, 1
  %v679 = vpop.permute.xlu0 %678
  %680 = vrot.lane.b32.xlu0 %v671, 1
  %v681 = vpop.permute.xlu0 %680
  %682 = vrot.lane.b32.xlu0 %v673, 1
  %v683 = vpop.permute.xlu0 %682
  %684 = vrot.lane.b32.xlu0 %v675, 1
  %v685 = vpop.permute.xlu0 %684
  %686 = vrot.lane.b32.xlu0 %v677, 1
  %v687 = vpop.permute.xlu0 %686
  %688 = vrot.lane.b32.xlu0 %v669, 127
  %v689 = vpop.permute.xlu0 %688
  %690 = vrot.lane.b32.xlu0 %v671, 127
  %v691 = vpop.permute.xlu0 %690
  %692 = vrot.lane.b32.xlu0 %v673, 127
  %v693 = vpop.permute.xlu0 %692
  %694 = vrot.lane.b32.xlu0 %v675, 127
  %v695 = vpop.permute.xlu0 %694
  %696 = vrot.lane.b32.xlu0 %v677, 127
  %v697 = vpop.permute.xlu0 %696
  %vm698 = vcmp.lt.s32.totalorder %v679, %v689
  %v699 = vsel %vm698, %v679, %v689
  %vm700 = vcmp.lt.s32.totalorder %v681, %v691
  %v701 = vsel %vm700, %v681, %v691
  %vm702 = vcmp.lt.s32.totalorder %v683, %v693
  %v703 = vsel %vm702, %v683, %v693
  %vm704 = vcmp.lt.s32.totalorder %v685, %v695
  %v705 = vsel %vm704, %v685, %v695
  %vm706 = vcmp.lt.s32.totalorder %v687, %v697
  %v707 = vsel %vm706, %v687, %v697
  %vm708 = vcmp.lt.s32.totalorder %v669, %v699
  %v709 = vsel %vm708, %v669, %v699
  %vm710 = vcmp.lt.s32.totalorder %v671, %v701
  %v711 = vsel %vm710, %v671, %v701
  %vm712 = vcmp.lt.s32.totalorder %v673, %v703
  %v713 = vsel %vm712, %v673, %v703
  %vm714 = vcmp.lt.s32.totalorder %v675, %v705
  %v715 = vsel %vm714, %v675, %v705
  %vm716 = vcmp.lt.s32.totalorder %v677, %v707
  %v717 = vsel %vm716, %v677, %v707
  %v718 = vsel %vm100, %v709, 1073741823
  %v719 = vsel %vm101, %v711, 1073741823
  %v720 = vsel %vm102, %v713, 1073741823
  %v721 = vsel %vm103, %v715, 1073741823
  %v722 = vsel %vm104, %v717, 1073741823
  %v723 = vrot.slane %v722, 7
  %v724 = vrot.slane %v718, 7
  %v725 = vrot.slane %v719, 7
  %v726 = vsel %vm34, %v724, %v725
  %v727 = vrot.slane %v720, 7
  %v728 = vsel %vm34, %v725, %v727
  %v729 = vrot.slane %v721, 7
  %v730 = vsel %vm34, %v727, %v729
  %v731 = vsel %vm34, %v729, %v723
  %v732 = vsel %vm34, %v723, %v724
  %v733 = vrot.slane %v718, 1
  %v734 = vrot.slane %v719, 1
  %v735 = vsel %vm49, %v733, %v734
  %v736 = vrot.slane %v720, 1
  %v737 = vsel %vm49, %v734, %v736
  %v738 = vrot.slane %v721, 1
  %v739 = vsel %vm49, %v736, %v738
  %v740 = vrot.slane %v722, 1
  %v741 = vsel %vm49, %v738, %v740
  %v742 = vsel %vm49, %v740, %v733
  %vm743 = vcmp.lt.s32.totalorder %v732, %v735
  %v744 = vsel %vm743, %v732, %v735
  %vm745 = vcmp.lt.s32.totalorder %v726, %v737
  %v746 = vsel %vm745, %v726, %v737
  %vm747 = vcmp.lt.s32.totalorder %v728, %v739
  %v748 = vsel %vm747, %v728, %v739
  %vm749 = vcmp.lt.s32.totalorder %v730, %v741
  %v750 = vsel %vm749, %v730, %v741
  %vm751 = vcmp.lt.s32.totalorder %v731, %v742
  %v752 = vsel %vm751, %v731, %v742
  %vm753 = vcmp.lt.s32.totalorder %v718, %v744
  %v754 = vsel %vm753, %v718, %v744
  %vm755 = vcmp.lt.s32.totalorder %v719, %v746
  %v756 = vsel %vm755, %v719, %v746
  %vm757 = vcmp.lt.s32.totalorder %v720, %v748
  %v758 = vsel %vm757, %v720, %v748
  %vm759 = vcmp.lt.s32.totalorder %v721, %v750
  %v760 = vsel %vm759, %v721, %v750
  %vm761 = vcmp.lt.s32.totalorder %v722, %v752
  %v762 = vsel %vm761, %v722, %v752
  %763 = vrot.lane.b32.xlu0 %v754, 1
  %v764 = vpop.permute.xlu0 %763
  %765 = vrot.lane.b32.xlu0 %v756, 1
  %v766 = vpop.permute.xlu0 %765
  %767 = vrot.lane.b32.xlu0 %v758, 1
  %v768 = vpop.permute.xlu0 %767
  %769 = vrot.lane.b32.xlu0 %v760, 1
  %v770 = vpop.permute.xlu0 %769
  %771 = vrot.lane.b32.xlu0 %v762, 1
  %v772 = vpop.permute.xlu0 %771
  %773 = vrot.lane.b32.xlu0 %v754, 127
  %v774 = vpop.permute.xlu0 %773
  %775 = vrot.lane.b32.xlu0 %v756, 127
  %v776 = vpop.permute.xlu0 %775
  %777 = vrot.lane.b32.xlu0 %v758, 127
  %v778 = vpop.permute.xlu0 %777
  %779 = vrot.lane.b32.xlu0 %v760, 127
  %v780 = vpop.permute.xlu0 %779
  %781 = vrot.lane.b32.xlu0 %v762, 127
  %v782 = vpop.permute.xlu0 %781
  %vm783 = vcmp.lt.s32.totalorder %v764, %v774
  %v784 = vsel %vm783, %v764, %v774
  %vm785 = vcmp.lt.s32.totalorder %v766, %v776
  %v786 = vsel %vm785, %v766, %v776
  %vm787 = vcmp.lt.s32.totalorder %v768, %v778
  %v788 = vsel %vm787, %v768, %v778
  %vm789 = vcmp.lt.s32.totalorder %v770, %v780
  %v790 = vsel %vm789, %v770, %v780
  %vm791 = vcmp.lt.s32.totalorder %v772, %v782
  %v792 = vsel %vm791, %v772, %v782
  %vm793 = vcmp.lt.s32.totalorder %v754, %v784
  %v794 = vsel %vm793, %v754, %v784
  %vm795 = vcmp.lt.s32.totalorder %v756, %v786
  %v796 = vsel %vm795, %v756, %v786
  %vm797 = vcmp.lt.s32.totalorder %v758, %v788
  %v798 = vsel %vm797, %v758, %v788
  %vm799 = vcmp.lt.s32.totalorder %v760, %v790
  %v800 = vsel %vm799, %v760, %v790
  %vm801 = vcmp.lt.s32.totalorder %v762, %v792
  %v802 = vsel %vm801, %v762, %v792
  %v803 = vsel %vm100, %v794, 1073741823
  %v804 = vsel %vm101, %v796, 1073741823
  %v805 = vsel %vm102, %v798, 1073741823
  %v806 = vsel %vm103, %v800, 1073741823
  %v807 = vsel %vm104, %v802, 1073741823
  %vm808 = vcmp.ne.s32.totalorder %v803, %v123
  %vm809 = vcmp.ne.s32.totalorder %v804, %v124
  %vm810 = vcmp.ne.s32.totalorder %v805, %v125
  %vm811 = vcmp.ne.s32.totalorder %v806, %v126
  %vm812 = vcmp.ne.s32.totalorder %v807, %v127
  %v813 = vsel %vm808, 1, 0
  %v814 = vsel %vm809, 1, 0
  %v815 = vsel %vm810, 1, 0
  %v816 = vsel %vm811, 1, 0
  %v817 = vsel %vm812, 1, 0
  %v818 = vadd.s32 %v813, %v817
  %v819 = vadd.s32 %v818, %v814
  %v820 = vadd.s32 %v815, %v816
  %v821 = vadd.s32 %v819, %v820
  %v822 = vand.u32 %v821, 65535
  %v823 = vshrl.u32 %v821, 16
  %v824 = vcvt.s32.f32 %v822
  %v825 = vcvt.s32.f32 %v823
  %826 = vadd.xlane.f32.xlu0 %v824
  %v827 = vpop.xlane.xlu0 %826
  %828 = vadd.xlane.f32.xlu0 %v825
  %v829 = vpop.xlane.xlu0 %828
  %v830 = vcvt.f32.s32 %v827
  %v831 = vcvt.f32.s32 %v829
  %v832 = vshll.u32 %v831, 16
  %v833 = vadd.s32 %v832, %v830
  %v834 = vrot.slane %v833, 4
  %v835 = vadd.s32 %v833, %v834
  %v836 = vrot.slane %v835, 2
  %v837 = vadd.s32 %v835, %v836
  %v838 = vrot.slane %v837, 1
  %v839 = vadd.s32 %v837, %v838
  %s840 = vtos %v839
  %p841 = scmp.gt.s32.totalorder %s840, 0
  // While loop
  $region6: #{dbscan_cluster.2} parent=0 // loop_pre_header
    _
  $region7: #{dbscan_cluster.2} parent=0 // loop_header
    %v843 = vphi %v803, %v1527
    %v844 = vphi %v804, %v1528
    %v845 = vphi %v805, %v1529
    %v846 = vphi %v806, %v1530
    %v847 = vphi %v807, %v1531
    %p848 = pphi %p841, %p1565
    %p849 = pneg %p848
  $region8: #{dbscan_cluster.2} parent=0 // loop_header_branch
    %851 = sbr.rel (%p849) target = $region12
  $region9: #{dbscan_cluster.2} parent=0 // loop_body
    %v852 = vrot.slane %v847, 7
    %v853 = vrot.slane %v843, 7
    %v854 = vrot.slane %v844, 7
    %v855 = vsel %vm34, %v853, %v854
    %v856 = vrot.slane %v845, 7
    %v857 = vsel %vm34, %v854, %v856
    %v858 = vrot.slane %v846, 7
    %v859 = vsel %vm34, %v856, %v858
    %v860 = vsel %vm34, %v858, %v852
    %v861 = vsel %vm34, %v852, %v853
    %v862 = vrot.slane %v843, 1
    %v863 = vrot.slane %v844, 1
    %v864 = vsel %vm49, %v862, %v863
    %v865 = vrot.slane %v845, 1
    %v866 = vsel %vm49, %v863, %v865
    %v867 = vrot.slane %v846, 1
    %v868 = vsel %vm49, %v865, %v867
    %v869 = vrot.slane %v847, 1
    %v870 = vsel %vm49, %v867, %v869
    %v871 = vsel %vm49, %v869, %v862
    %vm872 = vcmp.lt.s32.totalorder %v861, %v864
    %v873 = vsel %vm872, %v861, %v864
    %vm874 = vcmp.lt.s32.totalorder %v855, %v866
    %v875 = vsel %vm874, %v855, %v866
    %vm876 = vcmp.lt.s32.totalorder %v857, %v868
    %v877 = vsel %vm876, %v857, %v868
    %vm878 = vcmp.lt.s32.totalorder %v859, %v870
    %v879 = vsel %vm878, %v859, %v870
    %vm880 = vcmp.lt.s32.totalorder %v860, %v871
    %v881 = vsel %vm880, %v860, %v871
    %vm882 = vcmp.lt.s32.totalorder %v843, %v873
    %v883 = vsel %vm882, %v843, %v873
    %vm884 = vcmp.lt.s32.totalorder %v844, %v875
    %v885 = vsel %vm884, %v844, %v875
    %vm886 = vcmp.lt.s32.totalorder %v845, %v877
    %v887 = vsel %vm886, %v845, %v877
    %vm888 = vcmp.lt.s32.totalorder %v846, %v879
    %v889 = vsel %vm888, %v846, %v879
    %vm890 = vcmp.lt.s32.totalorder %v847, %v881
    %v891 = vsel %vm890, %v847, %v881
    %892 = vrot.lane.b32.xlu0 %v883, 1
    %v893 = vpop.permute.xlu0 %892
    %894 = vrot.lane.b32.xlu0 %v885, 1
    %v895 = vpop.permute.xlu0 %894
    %896 = vrot.lane.b32.xlu0 %v887, 1
    %v897 = vpop.permute.xlu0 %896
    %898 = vrot.lane.b32.xlu0 %v889, 1
    %v899 = vpop.permute.xlu0 %898
    %900 = vrot.lane.b32.xlu0 %v891, 1
    %v901 = vpop.permute.xlu0 %900
    %902 = vrot.lane.b32.xlu0 %v883, 127
    %v903 = vpop.permute.xlu0 %902
    %904 = vrot.lane.b32.xlu0 %v885, 127
    %v905 = vpop.permute.xlu0 %904
    %906 = vrot.lane.b32.xlu0 %v887, 127
    %v907 = vpop.permute.xlu0 %906
    %908 = vrot.lane.b32.xlu0 %v889, 127
    %v909 = vpop.permute.xlu0 %908
    %910 = vrot.lane.b32.xlu0 %v891, 127
    %v911 = vpop.permute.xlu0 %910
    %vm912 = vcmp.lt.s32.totalorder %v893, %v903
    %v913 = vsel %vm912, %v893, %v903
    %vm914 = vcmp.lt.s32.totalorder %v895, %v905
    %v915 = vsel %vm914, %v895, %v905
    %vm916 = vcmp.lt.s32.totalorder %v897, %v907
    %v917 = vsel %vm916, %v897, %v907
    %vm918 = vcmp.lt.s32.totalorder %v899, %v909
    %v919 = vsel %vm918, %v899, %v909
    %vm920 = vcmp.lt.s32.totalorder %v901, %v911
    %v921 = vsel %vm920, %v901, %v911
    %vm922 = vcmp.lt.s32.totalorder %v883, %v913
    %v923 = vsel %vm922, %v883, %v913
    %vm924 = vcmp.lt.s32.totalorder %v885, %v915
    %v925 = vsel %vm924, %v885, %v915
    %vm926 = vcmp.lt.s32.totalorder %v887, %v917
    %v927 = vsel %vm926, %v887, %v917
    %vm928 = vcmp.lt.s32.totalorder %v889, %v919
    %v929 = vsel %vm928, %v889, %v919
    %vm930 = vcmp.lt.s32.totalorder %v891, %v921
    %v931 = vsel %vm930, %v891, %v921
    %v932 = vsel %vm100, %v923, 1073741823
    %v933 = vsel %vm101, %v925, 1073741823
    %v934 = vsel %vm102, %v927, 1073741823
    %v935 = vsel %vm103, %v929, 1073741823
    %v936 = vsel %vm104, %v931, 1073741823
    %v937 = vrot.slane %v936, 7
    %v938 = vrot.slane %v932, 7
    %v939 = vrot.slane %v933, 7
    %v940 = vsel %vm34, %v938, %v939
    %v941 = vrot.slane %v934, 7
    %v942 = vsel %vm34, %v939, %v941
    %v943 = vrot.slane %v935, 7
    %v944 = vsel %vm34, %v941, %v943
    %v945 = vsel %vm34, %v943, %v937
    %v946 = vsel %vm34, %v937, %v938
    %v947 = vrot.slane %v932, 1
    %v948 = vrot.slane %v933, 1
    %v949 = vsel %vm49, %v947, %v948
    %v950 = vrot.slane %v934, 1
    %v951 = vsel %vm49, %v948, %v950
    %v952 = vrot.slane %v935, 1
    %v953 = vsel %vm49, %v950, %v952
    %v954 = vrot.slane %v936, 1
    %v955 = vsel %vm49, %v952, %v954
    %v956 = vsel %vm49, %v954, %v947
    %vm957 = vcmp.lt.s32.totalorder %v946, %v949
    %v958 = vsel %vm957, %v946, %v949
    %vm959 = vcmp.lt.s32.totalorder %v940, %v951
    %v960 = vsel %vm959, %v940, %v951
    %vm961 = vcmp.lt.s32.totalorder %v942, %v953
    %v962 = vsel %vm961, %v942, %v953
    %vm963 = vcmp.lt.s32.totalorder %v944, %v955
    %v964 = vsel %vm963, %v944, %v955
    %vm965 = vcmp.lt.s32.totalorder %v945, %v956
    %v966 = vsel %vm965, %v945, %v956
    %vm967 = vcmp.lt.s32.totalorder %v932, %v958
    %v968 = vsel %vm967, %v932, %v958
    %vm969 = vcmp.lt.s32.totalorder %v933, %v960
    %v970 = vsel %vm969, %v933, %v960
    %vm971 = vcmp.lt.s32.totalorder %v934, %v962
    %v972 = vsel %vm971, %v934, %v962
    %vm973 = vcmp.lt.s32.totalorder %v935, %v964
    %v974 = vsel %vm973, %v935, %v964
    %vm975 = vcmp.lt.s32.totalorder %v936, %v966
    %v976 = vsel %vm975, %v936, %v966
    %977 = vrot.lane.b32.xlu0 %v968, 1
    %v978 = vpop.permute.xlu0 %977
    %979 = vrot.lane.b32.xlu0 %v970, 1
    %v980 = vpop.permute.xlu0 %979
    %981 = vrot.lane.b32.xlu0 %v972, 1
    %v982 = vpop.permute.xlu0 %981
    %983 = vrot.lane.b32.xlu0 %v974, 1
    %v984 = vpop.permute.xlu0 %983
    %985 = vrot.lane.b32.xlu0 %v976, 1
    %v986 = vpop.permute.xlu0 %985
    %987 = vrot.lane.b32.xlu0 %v968, 127
    %v988 = vpop.permute.xlu0 %987
    %989 = vrot.lane.b32.xlu0 %v970, 127
    %v990 = vpop.permute.xlu0 %989
    %991 = vrot.lane.b32.xlu0 %v972, 127
    %v992 = vpop.permute.xlu0 %991
    %993 = vrot.lane.b32.xlu0 %v974, 127
    %v994 = vpop.permute.xlu0 %993
    %995 = vrot.lane.b32.xlu0 %v976, 127
    %v996 = vpop.permute.xlu0 %995
    %vm997 = vcmp.lt.s32.totalorder %v978, %v988
    %v998 = vsel %vm997, %v978, %v988
    %vm999 = vcmp.lt.s32.totalorder %v980, %v990
    %v1000 = vsel %vm999, %v980, %v990
    %vm1001 = vcmp.lt.s32.totalorder %v982, %v992
    %v1002 = vsel %vm1001, %v982, %v992
    %vm1003 = vcmp.lt.s32.totalorder %v984, %v994
    %v1004 = vsel %vm1003, %v984, %v994
    %vm1005 = vcmp.lt.s32.totalorder %v986, %v996
    %v1006 = vsel %vm1005, %v986, %v996
    %vm1007 = vcmp.lt.s32.totalorder %v968, %v998
    %v1008 = vsel %vm1007, %v968, %v998
    %vm1009 = vcmp.lt.s32.totalorder %v970, %v1000
    %v1010 = vsel %vm1009, %v970, %v1000
    %vm1011 = vcmp.lt.s32.totalorder %v972, %v1002
    %v1012 = vsel %vm1011, %v972, %v1002
    %vm1013 = vcmp.lt.s32.totalorder %v974, %v1004
    %v1014 = vsel %vm1013, %v974, %v1004
    %vm1015 = vcmp.lt.s32.totalorder %v976, %v1006
    %v1016 = vsel %vm1015, %v976, %v1006
    %v1017 = vsel %vm100, %v1008, 1073741823
    %v1018 = vsel %vm101, %v1010, 1073741823
    %v1019 = vsel %vm102, %v1012, 1073741823
    %v1020 = vsel %vm103, %v1014, 1073741823
    %v1021 = vsel %vm104, %v1016, 1073741823
    %v1022 = vrot.slane %v1021, 7
    %v1023 = vrot.slane %v1017, 7
    %v1024 = vrot.slane %v1018, 7
    %v1025 = vsel %vm34, %v1023, %v1024
    %v1026 = vrot.slane %v1019, 7
    %v1027 = vsel %vm34, %v1024, %v1026
    %v1028 = vrot.slane %v1020, 7
    %v1029 = vsel %vm34, %v1026, %v1028
    %v1030 = vsel %vm34, %v1028, %v1022
    %v1031 = vsel %vm34, %v1022, %v1023
    %v1032 = vrot.slane %v1017, 1
    %v1033 = vrot.slane %v1018, 1
    %v1034 = vsel %vm49, %v1032, %v1033
    %v1035 = vrot.slane %v1019, 1
    %v1036 = vsel %vm49, %v1033, %v1035
    %v1037 = vrot.slane %v1020, 1
    %v1038 = vsel %vm49, %v1035, %v1037
    %v1039 = vrot.slane %v1021, 1
    %v1040 = vsel %vm49, %v1037, %v1039
    %v1041 = vsel %vm49, %v1039, %v1032
    %vm1042 = vcmp.lt.s32.totalorder %v1031, %v1034
    %v1043 = vsel %vm1042, %v1031, %v1034
    %vm1044 = vcmp.lt.s32.totalorder %v1025, %v1036
    %v1045 = vsel %vm1044, %v1025, %v1036
    %vm1046 = vcmp.lt.s32.totalorder %v1027, %v1038
    %v1047 = vsel %vm1046, %v1027, %v1038
    %vm1048 = vcmp.lt.s32.totalorder %v1029, %v1040
    %v1049 = vsel %vm1048, %v1029, %v1040
    %vm1050 = vcmp.lt.s32.totalorder %v1030, %v1041
    %v1051 = vsel %vm1050, %v1030, %v1041
    %vm1052 = vcmp.lt.s32.totalorder %v1017, %v1043
    %v1053 = vsel %vm1052, %v1017, %v1043
    %vm1054 = vcmp.lt.s32.totalorder %v1018, %v1045
    %v1055 = vsel %vm1054, %v1018, %v1045
    %vm1056 = vcmp.lt.s32.totalorder %v1019, %v1047
    %v1057 = vsel %vm1056, %v1019, %v1047
    %vm1058 = vcmp.lt.s32.totalorder %v1020, %v1049
    %v1059 = vsel %vm1058, %v1020, %v1049
    %vm1060 = vcmp.lt.s32.totalorder %v1021, %v1051
    %v1061 = vsel %vm1060, %v1021, %v1051
    %1062 = vrot.lane.b32.xlu0 %v1053, 1
    %v1063 = vpop.permute.xlu0 %1062
    %1064 = vrot.lane.b32.xlu0 %v1055, 1
    %v1065 = vpop.permute.xlu0 %1064
    %1066 = vrot.lane.b32.xlu0 %v1057, 1
    %v1067 = vpop.permute.xlu0 %1066
    %1068 = vrot.lane.b32.xlu0 %v1059, 1
    %v1069 = vpop.permute.xlu0 %1068
    %1070 = vrot.lane.b32.xlu0 %v1061, 1
    %v1071 = vpop.permute.xlu0 %1070
    %1072 = vrot.lane.b32.xlu0 %v1053, 127
    %v1073 = vpop.permute.xlu0 %1072
    %1074 = vrot.lane.b32.xlu0 %v1055, 127
    %v1075 = vpop.permute.xlu0 %1074
    %1076 = vrot.lane.b32.xlu0 %v1057, 127
    %v1077 = vpop.permute.xlu0 %1076
    %1078 = vrot.lane.b32.xlu0 %v1059, 127
    %v1079 = vpop.permute.xlu0 %1078
    %1080 = vrot.lane.b32.xlu0 %v1061, 127
    %v1081 = vpop.permute.xlu0 %1080
    %vm1082 = vcmp.lt.s32.totalorder %v1063, %v1073
    %v1083 = vsel %vm1082, %v1063, %v1073
    %vm1084 = vcmp.lt.s32.totalorder %v1065, %v1075
    %v1085 = vsel %vm1084, %v1065, %v1075
    %vm1086 = vcmp.lt.s32.totalorder %v1067, %v1077
    %v1087 = vsel %vm1086, %v1067, %v1077
    %vm1088 = vcmp.lt.s32.totalorder %v1069, %v1079
    %v1089 = vsel %vm1088, %v1069, %v1079
    %vm1090 = vcmp.lt.s32.totalorder %v1071, %v1081
    %v1091 = vsel %vm1090, %v1071, %v1081
    %vm1092 = vcmp.lt.s32.totalorder %v1053, %v1083
    %v1093 = vsel %vm1092, %v1053, %v1083
    %vm1094 = vcmp.lt.s32.totalorder %v1055, %v1085
    %v1095 = vsel %vm1094, %v1055, %v1085
    %vm1096 = vcmp.lt.s32.totalorder %v1057, %v1087
    %v1097 = vsel %vm1096, %v1057, %v1087
    %vm1098 = vcmp.lt.s32.totalorder %v1059, %v1089
    %v1099 = vsel %vm1098, %v1059, %v1089
    %vm1100 = vcmp.lt.s32.totalorder %v1061, %v1091
    %v1101 = vsel %vm1100, %v1061, %v1091
    %v1102 = vsel %vm100, %v1093, 1073741823
    %v1103 = vsel %vm101, %v1095, 1073741823
    %v1104 = vsel %vm102, %v1097, 1073741823
    %v1105 = vsel %vm103, %v1099, 1073741823
    %v1106 = vsel %vm104, %v1101, 1073741823
    %v1107 = vrot.slane %v1106, 7
    %v1108 = vrot.slane %v1102, 7
    %v1109 = vrot.slane %v1103, 7
    %v1110 = vsel %vm34, %v1108, %v1109
    %v1111 = vrot.slane %v1104, 7
    %v1112 = vsel %vm34, %v1109, %v1111
    %v1113 = vrot.slane %v1105, 7
    %v1114 = vsel %vm34, %v1111, %v1113
    %v1115 = vsel %vm34, %v1113, %v1107
    %v1116 = vsel %vm34, %v1107, %v1108
    %v1117 = vrot.slane %v1102, 1
    %v1118 = vrot.slane %v1103, 1
    %v1119 = vsel %vm49, %v1117, %v1118
    %v1120 = vrot.slane %v1104, 1
    %v1121 = vsel %vm49, %v1118, %v1120
    %v1122 = vrot.slane %v1105, 1
    %v1123 = vsel %vm49, %v1120, %v1122
    %v1124 = vrot.slane %v1106, 1
    %v1125 = vsel %vm49, %v1122, %v1124
    %v1126 = vsel %vm49, %v1124, %v1117
    %vm1127 = vcmp.lt.s32.totalorder %v1116, %v1119
    %v1128 = vsel %vm1127, %v1116, %v1119
    %vm1129 = vcmp.lt.s32.totalorder %v1110, %v1121
    %v1130 = vsel %vm1129, %v1110, %v1121
    %vm1131 = vcmp.lt.s32.totalorder %v1112, %v1123
    %v1132 = vsel %vm1131, %v1112, %v1123
    %vm1133 = vcmp.lt.s32.totalorder %v1114, %v1125
    %v1134 = vsel %vm1133, %v1114, %v1125
    %vm1135 = vcmp.lt.s32.totalorder %v1115, %v1126
    %v1136 = vsel %vm1135, %v1115, %v1126
    %vm1137 = vcmp.lt.s32.totalorder %v1102, %v1128
    %v1138 = vsel %vm1137, %v1102, %v1128
    %vm1139 = vcmp.lt.s32.totalorder %v1103, %v1130
    %v1140 = vsel %vm1139, %v1103, %v1130
    %vm1141 = vcmp.lt.s32.totalorder %v1104, %v1132
    %v1142 = vsel %vm1141, %v1104, %v1132
    %vm1143 = vcmp.lt.s32.totalorder %v1105, %v1134
    %v1144 = vsel %vm1143, %v1105, %v1134
    %vm1145 = vcmp.lt.s32.totalorder %v1106, %v1136
    %v1146 = vsel %vm1145, %v1106, %v1136
    %1147 = vrot.lane.b32.xlu0 %v1138, 1
    %v1148 = vpop.permute.xlu0 %1147
    %1149 = vrot.lane.b32.xlu0 %v1140, 1
    %v1150 = vpop.permute.xlu0 %1149
    %1151 = vrot.lane.b32.xlu0 %v1142, 1
    %v1152 = vpop.permute.xlu0 %1151
    %1153 = vrot.lane.b32.xlu0 %v1144, 1
    %v1154 = vpop.permute.xlu0 %1153
    %1155 = vrot.lane.b32.xlu0 %v1146, 1
    %v1156 = vpop.permute.xlu0 %1155
    %1157 = vrot.lane.b32.xlu0 %v1138, 127
    %v1158 = vpop.permute.xlu0 %1157
    %1159 = vrot.lane.b32.xlu0 %v1140, 127
    %v1160 = vpop.permute.xlu0 %1159
    %1161 = vrot.lane.b32.xlu0 %v1142, 127
    %v1162 = vpop.permute.xlu0 %1161
    %1163 = vrot.lane.b32.xlu0 %v1144, 127
    %v1164 = vpop.permute.xlu0 %1163
    %1165 = vrot.lane.b32.xlu0 %v1146, 127
    %v1166 = vpop.permute.xlu0 %1165
    %vm1167 = vcmp.lt.s32.totalorder %v1148, %v1158
    %v1168 = vsel %vm1167, %v1148, %v1158
    %vm1169 = vcmp.lt.s32.totalorder %v1150, %v1160
    %v1170 = vsel %vm1169, %v1150, %v1160
    %vm1171 = vcmp.lt.s32.totalorder %v1152, %v1162
    %v1172 = vsel %vm1171, %v1152, %v1162
    %vm1173 = vcmp.lt.s32.totalorder %v1154, %v1164
    %v1174 = vsel %vm1173, %v1154, %v1164
    %vm1175 = vcmp.lt.s32.totalorder %v1156, %v1166
    %v1176 = vsel %vm1175, %v1156, %v1166
    %vm1177 = vcmp.lt.s32.totalorder %v1138, %v1168
    %v1178 = vsel %vm1177, %v1138, %v1168
    %vm1179 = vcmp.lt.s32.totalorder %v1140, %v1170
    %v1180 = vsel %vm1179, %v1140, %v1170
    %vm1181 = vcmp.lt.s32.totalorder %v1142, %v1172
    %v1182 = vsel %vm1181, %v1142, %v1172
    %vm1183 = vcmp.lt.s32.totalorder %v1144, %v1174
    %v1184 = vsel %vm1183, %v1144, %v1174
    %vm1185 = vcmp.lt.s32.totalorder %v1146, %v1176
    %v1186 = vsel %vm1185, %v1146, %v1176
    %v1187 = vsel %vm100, %v1178, 1073741823
    %v1188 = vsel %vm101, %v1180, 1073741823
    %v1189 = vsel %vm102, %v1182, 1073741823
    %v1190 = vsel %vm103, %v1184, 1073741823
    %v1191 = vsel %vm104, %v1186, 1073741823
    %v1192 = vrot.slane %v1191, 7
    %v1193 = vrot.slane %v1187, 7
    %v1194 = vrot.slane %v1188, 7
    %v1195 = vsel %vm34, %v1193, %v1194
    %v1196 = vrot.slane %v1189, 7
    %v1197 = vsel %vm34, %v1194, %v1196
    %v1198 = vrot.slane %v1190, 7
    %v1199 = vsel %vm34, %v1196, %v1198
    %v1200 = vsel %vm34, %v1198, %v1192
    %v1201 = vsel %vm34, %v1192, %v1193
    %v1202 = vrot.slane %v1187, 1
    %v1203 = vrot.slane %v1188, 1
    %v1204 = vsel %vm49, %v1202, %v1203
    %v1205 = vrot.slane %v1189, 1
    %v1206 = vsel %vm49, %v1203, %v1205
    %v1207 = vrot.slane %v1190, 1
    %v1208 = vsel %vm49, %v1205, %v1207
    %v1209 = vrot.slane %v1191, 1
    %v1210 = vsel %vm49, %v1207, %v1209
    %v1211 = vsel %vm49, %v1209, %v1202
    %vm1212 = vcmp.lt.s32.totalorder %v1201, %v1204
    %v1213 = vsel %vm1212, %v1201, %v1204
    %vm1214 = vcmp.lt.s32.totalorder %v1195, %v1206
    %v1215 = vsel %vm1214, %v1195, %v1206
    %vm1216 = vcmp.lt.s32.totalorder %v1197, %v1208
    %v1217 = vsel %vm1216, %v1197, %v1208
    %vm1218 = vcmp.lt.s32.totalorder %v1199, %v1210
    %v1219 = vsel %vm1218, %v1199, %v1210
    %vm1220 = vcmp.lt.s32.totalorder %v1200, %v1211
    %v1221 = vsel %vm1220, %v1200, %v1211
    %vm1222 = vcmp.lt.s32.totalorder %v1187, %v1213
    %v1223 = vsel %vm1222, %v1187, %v1213
    %vm1224 = vcmp.lt.s32.totalorder %v1188, %v1215
    %v1225 = vsel %vm1224, %v1188, %v1215
    %vm1226 = vcmp.lt.s32.totalorder %v1189, %v1217
    %v1227 = vsel %vm1226, %v1189, %v1217
    %vm1228 = vcmp.lt.s32.totalorder %v1190, %v1219
    %v1229 = vsel %vm1228, %v1190, %v1219
    %vm1230 = vcmp.lt.s32.totalorder %v1191, %v1221
    %v1231 = vsel %vm1230, %v1191, %v1221
    %1232 = vrot.lane.b32.xlu0 %v1223, 1
    %v1233 = vpop.permute.xlu0 %1232
    %1234 = vrot.lane.b32.xlu0 %v1225, 1
    %v1235 = vpop.permute.xlu0 %1234
    %1236 = vrot.lane.b32.xlu0 %v1227, 1
    %v1237 = vpop.permute.xlu0 %1236
    %1238 = vrot.lane.b32.xlu0 %v1229, 1
    %v1239 = vpop.permute.xlu0 %1238
    %1240 = vrot.lane.b32.xlu0 %v1231, 1
    %v1241 = vpop.permute.xlu0 %1240
    %1242 = vrot.lane.b32.xlu0 %v1223, 127
    %v1243 = vpop.permute.xlu0 %1242
    %1244 = vrot.lane.b32.xlu0 %v1225, 127
    %v1245 = vpop.permute.xlu0 %1244
    %1246 = vrot.lane.b32.xlu0 %v1227, 127
    %v1247 = vpop.permute.xlu0 %1246
    %1248 = vrot.lane.b32.xlu0 %v1229, 127
    %v1249 = vpop.permute.xlu0 %1248
    %1250 = vrot.lane.b32.xlu0 %v1231, 127
    %v1251 = vpop.permute.xlu0 %1250
    %vm1252 = vcmp.lt.s32.totalorder %v1233, %v1243
    %v1253 = vsel %vm1252, %v1233, %v1243
    %vm1254 = vcmp.lt.s32.totalorder %v1235, %v1245
    %v1255 = vsel %vm1254, %v1235, %v1245
    %vm1256 = vcmp.lt.s32.totalorder %v1237, %v1247
    %v1257 = vsel %vm1256, %v1237, %v1247
    %vm1258 = vcmp.lt.s32.totalorder %v1239, %v1249
    %v1259 = vsel %vm1258, %v1239, %v1249
    %vm1260 = vcmp.lt.s32.totalorder %v1241, %v1251
    %v1261 = vsel %vm1260, %v1241, %v1251
    %vm1262 = vcmp.lt.s32.totalorder %v1223, %v1253
    %v1263 = vsel %vm1262, %v1223, %v1253
    %vm1264 = vcmp.lt.s32.totalorder %v1225, %v1255
    %v1265 = vsel %vm1264, %v1225, %v1255
    %vm1266 = vcmp.lt.s32.totalorder %v1227, %v1257
    %v1267 = vsel %vm1266, %v1227, %v1257
    %vm1268 = vcmp.lt.s32.totalorder %v1229, %v1259
    %v1269 = vsel %vm1268, %v1229, %v1259
    %vm1270 = vcmp.lt.s32.totalorder %v1231, %v1261
    %v1271 = vsel %vm1270, %v1231, %v1261
    %v1272 = vsel %vm100, %v1263, 1073741823
    %v1273 = vsel %vm101, %v1265, 1073741823
    %v1274 = vsel %vm102, %v1267, 1073741823
    %v1275 = vsel %vm103, %v1269, 1073741823
    %v1276 = vsel %vm104, %v1271, 1073741823
    %v1277 = vrot.slane %v1276, 7
    %v1278 = vrot.slane %v1272, 7
    %v1279 = vrot.slane %v1273, 7
    %v1280 = vsel %vm34, %v1278, %v1279
    %v1281 = vrot.slane %v1274, 7
    %v1282 = vsel %vm34, %v1279, %v1281
    %v1283 = vrot.slane %v1275, 7
    %v1284 = vsel %vm34, %v1281, %v1283
    %v1285 = vsel %vm34, %v1283, %v1277
    %v1286 = vsel %vm34, %v1277, %v1278
    %v1287 = vrot.slane %v1272, 1
    %v1288 = vrot.slane %v1273, 1
    %v1289 = vsel %vm49, %v1287, %v1288
    %v1290 = vrot.slane %v1274, 1
    %v1291 = vsel %vm49, %v1288, %v1290
    %v1292 = vrot.slane %v1275, 1
    %v1293 = vsel %vm49, %v1290, %v1292
    %v1294 = vrot.slane %v1276, 1
    %v1295 = vsel %vm49, %v1292, %v1294
    %v1296 = vsel %vm49, %v1294, %v1287
    %vm1297 = vcmp.lt.s32.totalorder %v1286, %v1289
    %v1298 = vsel %vm1297, %v1286, %v1289
    %vm1299 = vcmp.lt.s32.totalorder %v1280, %v1291
    %v1300 = vsel %vm1299, %v1280, %v1291
    %vm1301 = vcmp.lt.s32.totalorder %v1282, %v1293
    %v1302 = vsel %vm1301, %v1282, %v1293
    %vm1303 = vcmp.lt.s32.totalorder %v1284, %v1295
    %v1304 = vsel %vm1303, %v1284, %v1295
    %vm1305 = vcmp.lt.s32.totalorder %v1285, %v1296
    %v1306 = vsel %vm1305, %v1285, %v1296
    %vm1307 = vcmp.lt.s32.totalorder %v1272, %v1298
    %v1308 = vsel %vm1307, %v1272, %v1298
    %vm1309 = vcmp.lt.s32.totalorder %v1273, %v1300
    %v1310 = vsel %vm1309, %v1273, %v1300
    %vm1311 = vcmp.lt.s32.totalorder %v1274, %v1302
    %v1312 = vsel %vm1311, %v1274, %v1302
    %vm1313 = vcmp.lt.s32.totalorder %v1275, %v1304
    %v1314 = vsel %vm1313, %v1275, %v1304
    %vm1315 = vcmp.lt.s32.totalorder %v1276, %v1306
    %v1316 = vsel %vm1315, %v1276, %v1306
    %1317 = vrot.lane.b32.xlu0 %v1308, 1
    %v1318 = vpop.permute.xlu0 %1317
    %1319 = vrot.lane.b32.xlu0 %v1310, 1
    %v1320 = vpop.permute.xlu0 %1319
    %1321 = vrot.lane.b32.xlu0 %v1312, 1
    %v1322 = vpop.permute.xlu0 %1321
    %1323 = vrot.lane.b32.xlu0 %v1314, 1
    %v1324 = vpop.permute.xlu0 %1323
    %1325 = vrot.lane.b32.xlu0 %v1316, 1
    %v1326 = vpop.permute.xlu0 %1325
    %1327 = vrot.lane.b32.xlu0 %v1308, 127
    %v1328 = vpop.permute.xlu0 %1327
    %1329 = vrot.lane.b32.xlu0 %v1310, 127
    %v1330 = vpop.permute.xlu0 %1329
    %1331 = vrot.lane.b32.xlu0 %v1312, 127
    %v1332 = vpop.permute.xlu0 %1331
    %1333 = vrot.lane.b32.xlu0 %v1314, 127
    %v1334 = vpop.permute.xlu0 %1333
    %1335 = vrot.lane.b32.xlu0 %v1316, 127
    %v1336 = vpop.permute.xlu0 %1335
    %vm1337 = vcmp.lt.s32.totalorder %v1318, %v1328
    %v1338 = vsel %vm1337, %v1318, %v1328
    %vm1339 = vcmp.lt.s32.totalorder %v1320, %v1330
    %v1340 = vsel %vm1339, %v1320, %v1330
    %vm1341 = vcmp.lt.s32.totalorder %v1322, %v1332
    %v1342 = vsel %vm1341, %v1322, %v1332
    %vm1343 = vcmp.lt.s32.totalorder %v1324, %v1334
    %v1344 = vsel %vm1343, %v1324, %v1334
    %vm1345 = vcmp.lt.s32.totalorder %v1326, %v1336
    %v1346 = vsel %vm1345, %v1326, %v1336
    %vm1347 = vcmp.lt.s32.totalorder %v1308, %v1338
    %v1348 = vsel %vm1347, %v1308, %v1338
    %vm1349 = vcmp.lt.s32.totalorder %v1310, %v1340
    %v1350 = vsel %vm1349, %v1310, %v1340
    %vm1351 = vcmp.lt.s32.totalorder %v1312, %v1342
    %v1352 = vsel %vm1351, %v1312, %v1342
    %vm1353 = vcmp.lt.s32.totalorder %v1314, %v1344
    %v1354 = vsel %vm1353, %v1314, %v1344
    %vm1355 = vcmp.lt.s32.totalorder %v1316, %v1346
    %v1356 = vsel %vm1355, %v1316, %v1346
    %v1357 = vsel %vm100, %v1348, 1073741823
    %v1358 = vsel %vm101, %v1350, 1073741823
    %v1359 = vsel %vm102, %v1352, 1073741823
    %v1360 = vsel %vm103, %v1354, 1073741823
    %v1361 = vsel %vm104, %v1356, 1073741823
    %v1362 = vrot.slane %v1361, 7
    %v1363 = vrot.slane %v1357, 7
    %v1364 = vrot.slane %v1358, 7
    %v1365 = vsel %vm34, %v1363, %v1364
    %v1366 = vrot.slane %v1359, 7
    %v1367 = vsel %vm34, %v1364, %v1366
    %v1368 = vrot.slane %v1360, 7
    %v1369 = vsel %vm34, %v1366, %v1368
    %v1370 = vsel %vm34, %v1368, %v1362
    %v1371 = vsel %vm34, %v1362, %v1363
    %v1372 = vrot.slane %v1357, 1
    %v1373 = vrot.slane %v1358, 1
    %v1374 = vsel %vm49, %v1372, %v1373
    %v1375 = vrot.slane %v1359, 1
    %v1376 = vsel %vm49, %v1373, %v1375
    %v1377 = vrot.slane %v1360, 1
    %v1378 = vsel %vm49, %v1375, %v1377
    %v1379 = vrot.slane %v1361, 1
    %v1380 = vsel %vm49, %v1377, %v1379
    %v1381 = vsel %vm49, %v1379, %v1372
    %vm1382 = vcmp.lt.s32.totalorder %v1371, %v1374
    %v1383 = vsel %vm1382, %v1371, %v1374
    %vm1384 = vcmp.lt.s32.totalorder %v1365, %v1376
    %v1385 = vsel %vm1384, %v1365, %v1376
    %vm1386 = vcmp.lt.s32.totalorder %v1367, %v1378
    %v1387 = vsel %vm1386, %v1367, %v1378
    %vm1388 = vcmp.lt.s32.totalorder %v1369, %v1380
    %v1389 = vsel %vm1388, %v1369, %v1380
    %vm1390 = vcmp.lt.s32.totalorder %v1370, %v1381
    %v1391 = vsel %vm1390, %v1370, %v1381
    %vm1392 = vcmp.lt.s32.totalorder %v1357, %v1383
    %v1393 = vsel %vm1392, %v1357, %v1383
    %vm1394 = vcmp.lt.s32.totalorder %v1358, %v1385
    %v1395 = vsel %vm1394, %v1358, %v1385
    %vm1396 = vcmp.lt.s32.totalorder %v1359, %v1387
    %v1397 = vsel %vm1396, %v1359, %v1387
    %vm1398 = vcmp.lt.s32.totalorder %v1360, %v1389
    %v1399 = vsel %vm1398, %v1360, %v1389
    %vm1400 = vcmp.lt.s32.totalorder %v1361, %v1391
    %v1401 = vsel %vm1400, %v1361, %v1391
    %1402 = vrot.lane.b32.xlu0 %v1393, 1
    %v1403 = vpop.permute.xlu0 %1402
    %1404 = vrot.lane.b32.xlu0 %v1395, 1
    %v1405 = vpop.permute.xlu0 %1404
    %1406 = vrot.lane.b32.xlu0 %v1397, 1
    %v1407 = vpop.permute.xlu0 %1406
    %1408 = vrot.lane.b32.xlu0 %v1399, 1
    %v1409 = vpop.permute.xlu0 %1408
    %1410 = vrot.lane.b32.xlu0 %v1401, 1
    %v1411 = vpop.permute.xlu0 %1410
    %1412 = vrot.lane.b32.xlu0 %v1393, 127
    %v1413 = vpop.permute.xlu0 %1412
    %1414 = vrot.lane.b32.xlu0 %v1395, 127
    %v1415 = vpop.permute.xlu0 %1414
    %1416 = vrot.lane.b32.xlu0 %v1397, 127
    %v1417 = vpop.permute.xlu0 %1416
    %1418 = vrot.lane.b32.xlu0 %v1399, 127
    %v1419 = vpop.permute.xlu0 %1418
    %1420 = vrot.lane.b32.xlu0 %v1401, 127
    %v1421 = vpop.permute.xlu0 %1420
    %vm1422 = vcmp.lt.s32.totalorder %v1403, %v1413
    %v1423 = vsel %vm1422, %v1403, %v1413
    %vm1424 = vcmp.lt.s32.totalorder %v1405, %v1415
    %v1425 = vsel %vm1424, %v1405, %v1415
    %vm1426 = vcmp.lt.s32.totalorder %v1407, %v1417
    %v1427 = vsel %vm1426, %v1407, %v1417
    %vm1428 = vcmp.lt.s32.totalorder %v1409, %v1419
    %v1429 = vsel %vm1428, %v1409, %v1419
    %vm1430 = vcmp.lt.s32.totalorder %v1411, %v1421
    %v1431 = vsel %vm1430, %v1411, %v1421
    %vm1432 = vcmp.lt.s32.totalorder %v1393, %v1423
    %v1433 = vsel %vm1432, %v1393, %v1423
    %vm1434 = vcmp.lt.s32.totalorder %v1395, %v1425
    %v1435 = vsel %vm1434, %v1395, %v1425
    %vm1436 = vcmp.lt.s32.totalorder %v1397, %v1427
    %v1437 = vsel %vm1436, %v1397, %v1427
    %vm1438 = vcmp.lt.s32.totalorder %v1399, %v1429
    %v1439 = vsel %vm1438, %v1399, %v1429
    %vm1440 = vcmp.lt.s32.totalorder %v1401, %v1431
    %v1441 = vsel %vm1440, %v1401, %v1431
    %v1442 = vsel %vm100, %v1433, 1073741823
    %v1443 = vsel %vm101, %v1435, 1073741823
    %v1444 = vsel %vm102, %v1437, 1073741823
    %v1445 = vsel %vm103, %v1439, 1073741823
    %v1446 = vsel %vm104, %v1441, 1073741823
    %v1447 = vrot.slane %v1446, 7
    %v1448 = vrot.slane %v1442, 7
    %v1449 = vrot.slane %v1443, 7
    %v1450 = vsel %vm34, %v1448, %v1449
    %v1451 = vrot.slane %v1444, 7
    %v1452 = vsel %vm34, %v1449, %v1451
    %v1453 = vrot.slane %v1445, 7
    %v1454 = vsel %vm34, %v1451, %v1453
    %v1455 = vsel %vm34, %v1453, %v1447
    %v1456 = vsel %vm34, %v1447, %v1448
    %v1457 = vrot.slane %v1442, 1
    %v1458 = vrot.slane %v1443, 1
    %v1459 = vsel %vm49, %v1457, %v1458
    %v1460 = vrot.slane %v1444, 1
    %v1461 = vsel %vm49, %v1458, %v1460
    %v1462 = vrot.slane %v1445, 1
    %v1463 = vsel %vm49, %v1460, %v1462
    %v1464 = vrot.slane %v1446, 1
    %v1465 = vsel %vm49, %v1462, %v1464
    %v1466 = vsel %vm49, %v1464, %v1457
    %vm1467 = vcmp.lt.s32.totalorder %v1456, %v1459
    %v1468 = vsel %vm1467, %v1456, %v1459
    %vm1469 = vcmp.lt.s32.totalorder %v1450, %v1461
    %v1470 = vsel %vm1469, %v1450, %v1461
    %vm1471 = vcmp.lt.s32.totalorder %v1452, %v1463
    %v1472 = vsel %vm1471, %v1452, %v1463
    %vm1473 = vcmp.lt.s32.totalorder %v1454, %v1465
    %v1474 = vsel %vm1473, %v1454, %v1465
    %vm1475 = vcmp.lt.s32.totalorder %v1455, %v1466
    %v1476 = vsel %vm1475, %v1455, %v1466
    %vm1477 = vcmp.lt.s32.totalorder %v1442, %v1468
    %v1478 = vsel %vm1477, %v1442, %v1468
    %vm1479 = vcmp.lt.s32.totalorder %v1443, %v1470
    %v1480 = vsel %vm1479, %v1443, %v1470
    %vm1481 = vcmp.lt.s32.totalorder %v1444, %v1472
    %v1482 = vsel %vm1481, %v1444, %v1472
    %vm1483 = vcmp.lt.s32.totalorder %v1445, %v1474
    %v1484 = vsel %vm1483, %v1445, %v1474
    %vm1485 = vcmp.lt.s32.totalorder %v1446, %v1476
    %v1486 = vsel %vm1485, %v1446, %v1476
    %1487 = vrot.lane.b32.xlu0 %v1478, 1
    %v1488 = vpop.permute.xlu0 %1487
    %1489 = vrot.lane.b32.xlu0 %v1480, 1
    %v1490 = vpop.permute.xlu0 %1489
    %1491 = vrot.lane.b32.xlu0 %v1482, 1
    %v1492 = vpop.permute.xlu0 %1491
    %1493 = vrot.lane.b32.xlu0 %v1484, 1
    %v1494 = vpop.permute.xlu0 %1493
    %1495 = vrot.lane.b32.xlu0 %v1486, 1
    %v1496 = vpop.permute.xlu0 %1495
    %1497 = vrot.lane.b32.xlu0 %v1478, 127
    %v1498 = vpop.permute.xlu0 %1497
    %1499 = vrot.lane.b32.xlu0 %v1480, 127
    %v1500 = vpop.permute.xlu0 %1499
    %1501 = vrot.lane.b32.xlu0 %v1482, 127
    %v1502 = vpop.permute.xlu0 %1501
    %1503 = vrot.lane.b32.xlu0 %v1484, 127
    %v1504 = vpop.permute.xlu0 %1503
    %1505 = vrot.lane.b32.xlu0 %v1486, 127
    %v1506 = vpop.permute.xlu0 %1505
    %vm1507 = vcmp.lt.s32.totalorder %v1488, %v1498
    %v1508 = vsel %vm1507, %v1488, %v1498
    %vm1509 = vcmp.lt.s32.totalorder %v1490, %v1500
    %v1510 = vsel %vm1509, %v1490, %v1500
    %vm1511 = vcmp.lt.s32.totalorder %v1492, %v1502
    %v1512 = vsel %vm1511, %v1492, %v1502
    %vm1513 = vcmp.lt.s32.totalorder %v1494, %v1504
    %v1514 = vsel %vm1513, %v1494, %v1504
    %vm1515 = vcmp.lt.s32.totalorder %v1496, %v1506
    %v1516 = vsel %vm1515, %v1496, %v1506
    %vm1517 = vcmp.lt.s32.totalorder %v1478, %v1508
    %v1518 = vsel %vm1517, %v1478, %v1508
    %vm1519 = vcmp.lt.s32.totalorder %v1480, %v1510
    %v1520 = vsel %vm1519, %v1480, %v1510
    %vm1521 = vcmp.lt.s32.totalorder %v1482, %v1512
    %v1522 = vsel %vm1521, %v1482, %v1512
    %vm1523 = vcmp.lt.s32.totalorder %v1484, %v1514
    %v1524 = vsel %vm1523, %v1484, %v1514
    %vm1525 = vcmp.lt.s32.totalorder %v1486, %v1516
    %v1526 = vsel %vm1525, %v1486, %v1516
    %v1527 = vsel %vm100, %v1518, 1073741823
    %v1528 = vsel %vm101, %v1520, 1073741823
    %v1529 = vsel %vm102, %v1522, 1073741823
    %v1530 = vsel %vm103, %v1524, 1073741823
    %v1531 = vsel %vm104, %v1526, 1073741823
    %vm1532 = vcmp.ne.s32.totalorder %v1527, %v843
    %vm1533 = vcmp.ne.s32.totalorder %v1528, %v844
    %vm1534 = vcmp.ne.s32.totalorder %v1529, %v845
    %vm1535 = vcmp.ne.s32.totalorder %v1530, %v846
    %vm1536 = vcmp.ne.s32.totalorder %v1531, %v847
    %v1537 = vsel %vm1532, 1, 0
    %v1538 = vsel %vm1533, 1, 0
    %v1539 = vsel %vm1534, 1, 0
    %v1540 = vsel %vm1535, 1, 0
    %v1541 = vsel %vm1536, 1, 0
    %v1542 = vadd.s32 %v1537, %v1541
    %v1543 = vadd.s32 %v1542, %v1538
    %v1544 = vadd.s32 %v1539, %v1540
    %v1545 = vadd.s32 %v1543, %v1544
    %v1546 = vand.u32 %v1545, 65535
    %v1547 = vshrl.u32 %v1545, 16
    %v1548 = vcvt.s32.f32 %v1546
    %v1549 = vcvt.s32.f32 %v1547
    %1550 = vadd.xlane.f32.xlu0 %v1548
    %v1551 = vpop.xlane.xlu0 %1550
    %1552 = vadd.xlane.f32.xlu0 %v1549
    %v1553 = vpop.xlane.xlu0 %1552
    %v1554 = vcvt.f32.s32 %v1551
    %v1555 = vcvt.f32.s32 %v1553
    %v1556 = vshll.u32 %v1555, 16
    %v1557 = vadd.s32 %v1556, %v1554
    %v1558 = vrot.slane %v1557, 4
    %v1559 = vadd.s32 %v1557, %v1558
    %v1560 = vrot.slane %v1559, 2
    %v1561 = vadd.s32 %v1559, %v1560
    %v1562 = vrot.slane %v1561, 1
    %v1563 = vadd.s32 %v1561, %v1562
    %s1564 = vtos %v1563
    %p1565 = scmp.gt.s32.totalorder %s1564, 0
  $region10: #{dbscan_cluster.2} parent=0 // loop_footer
    _
  $region11: #{dbscan_cluster.2} parent=0 // loop_footer_branch
    %842 = sbr.rel target = $region7
  $region12: #{dbscan_cluster.2} parent=0 // loop_exit
    _
  %v1566 = vrot.slane %v847, 7
  %v1567 = vrot.slane %v843, 7
  %v1568 = vrot.slane %v844, 7
  %v1569 = vsel %vm34, %v1567, %v1568
  %v1570 = vrot.slane %v845, 7
  %v1571 = vsel %vm34, %v1568, %v1570
  %v1572 = vrot.slane %v846, 7
  %v1573 = vsel %vm34, %v1570, %v1572
  %v1574 = vsel %vm34, %v1572, %v1566
  %v1575 = vsel %vm34, %v1566, %v1567
  %v1576 = vrot.slane %v843, 1
  %v1577 = vrot.slane %v844, 1
  %v1578 = vsel %vm49, %v1576, %v1577
  %v1579 = vrot.slane %v845, 1
  %v1580 = vsel %vm49, %v1577, %v1579
  %v1581 = vrot.slane %v846, 1
  %v1582 = vsel %vm49, %v1579, %v1581
  %v1583 = vrot.slane %v847, 1
  %v1584 = vsel %vm49, %v1581, %v1583
  %v1585 = vsel %vm49, %v1583, %v1576
  %vm1586 = vcmp.lt.s32.totalorder %v1575, %v1578
  %v1587 = vsel %vm1586, %v1575, %v1578
  %vm1588 = vcmp.lt.s32.totalorder %v1569, %v1580
  %v1589 = vsel %vm1588, %v1569, %v1580
  %vm1590 = vcmp.lt.s32.totalorder %v1571, %v1582
  %v1591 = vsel %vm1590, %v1571, %v1582
  %vm1592 = vcmp.lt.s32.totalorder %v1573, %v1584
  %v1593 = vsel %vm1592, %v1573, %v1584
  %vm1594 = vcmp.lt.s32.totalorder %v1574, %v1585
  %v1595 = vsel %vm1594, %v1574, %v1585
  %vm1596 = vcmp.lt.s32.totalorder %v843, %v1587
  %v1597 = vsel %vm1596, %v843, %v1587
  %vm1598 = vcmp.lt.s32.totalorder %v844, %v1589
  %v1599 = vsel %vm1598, %v844, %v1589
  %vm1600 = vcmp.lt.s32.totalorder %v845, %v1591
  %v1601 = vsel %vm1600, %v845, %v1591
  %vm1602 = vcmp.lt.s32.totalorder %v846, %v1593
  %v1603 = vsel %vm1602, %v846, %v1593
  %vm1604 = vcmp.lt.s32.totalorder %v847, %v1595
  %v1605 = vsel %vm1604, %v847, %v1595
  %1606 = vrot.lane.b32.xlu0 %v1597, 1
  %v1607 = vpop.permute.xlu0 %1606
  %1608 = vrot.lane.b32.xlu0 %v1599, 1
  %v1609 = vpop.permute.xlu0 %1608
  %1610 = vrot.lane.b32.xlu0 %v1601, 1
  %v1611 = vpop.permute.xlu0 %1610
  %1612 = vrot.lane.b32.xlu0 %v1603, 1
  %v1613 = vpop.permute.xlu0 %1612
  %1614 = vrot.lane.b32.xlu0 %v1605, 1
  %v1615 = vpop.permute.xlu0 %1614
  %1616 = vrot.lane.b32.xlu0 %v1597, 127
  %v1617 = vpop.permute.xlu0 %1616
  %1618 = vrot.lane.b32.xlu0 %v1599, 127
  %v1619 = vpop.permute.xlu0 %1618
  %1620 = vrot.lane.b32.xlu0 %v1601, 127
  %v1621 = vpop.permute.xlu0 %1620
  %1622 = vrot.lane.b32.xlu0 %v1603, 127
  %v1623 = vpop.permute.xlu0 %1622
  %1624 = vrot.lane.b32.xlu0 %v1605, 127
  %v1625 = vpop.permute.xlu0 %1624
  %vm1626 = vcmp.lt.s32.totalorder %v1607, %v1617
  %v1627 = vsel %vm1626, %v1607, %v1617
  %vm1628 = vcmp.lt.s32.totalorder %v1609, %v1619
  %v1629 = vsel %vm1628, %v1609, %v1619
  %vm1630 = vcmp.lt.s32.totalorder %v1611, %v1621
  %v1631 = vsel %vm1630, %v1611, %v1621
  %vm1632 = vcmp.lt.s32.totalorder %v1613, %v1623
  %v1633 = vsel %vm1632, %v1613, %v1623
  %vm1634 = vcmp.lt.s32.totalorder %v1615, %v1625
  %v1635 = vsel %vm1634, %v1615, %v1625
  %vm1636 = vcmp.lt.s32.totalorder %v1597, %v1627
  %v1637 = vsel %vm1636, %v1597, %v1627
  %vm1638 = vcmp.lt.s32.totalorder %v1599, %v1629
  %v1639 = vsel %vm1638, %v1599, %v1629
  %vm1640 = vcmp.lt.s32.totalorder %v1601, %v1631
  %v1641 = vsel %vm1640, %v1601, %v1631
  %vm1642 = vcmp.lt.s32.totalorder %v1603, %v1633
  %v1643 = vsel %vm1642, %v1603, %v1633
  %vm1644 = vcmp.lt.s32.totalorder %v1605, %v1635
  %v1645 = vsel %vm1644, %v1605, %v1635
  %vm1646 = vmxor %vm100, 1
  %vm1647 = vmxor %vm101, 1
  %vm1648 = vmxor %vm102, 1
  %vm1649 = vmxor %vm103, 1
  %vm1650 = vmxor %vm104, 1
  %vm1651 = vmand %vm28, %vm1646
  %vm1652 = vmand %vm29, %vm1647
  %vm1653 = vmand %vm30, %vm1648
  %vm1654 = vmand %vm31, %vm1649
  %vm1655 = vmand %vm32, %vm1650
  %vm1656 = vcmp.lt.s32.totalorder %v1637, 1073741823
  %vm1657 = vcmp.lt.s32.totalorder %v1639, 1073741823
  %vm1658 = vcmp.lt.s32.totalorder %v1641, 1073741823
  %vm1659 = vcmp.lt.s32.totalorder %v1643, 1073741823
  %vm1660 = vcmp.lt.s32.totalorder %v1645, 1073741823
  %vm1661 = vmand %vm1651, %vm1656
  %vm1662 = vmand %vm1652, %vm1657
  %vm1663 = vmand %vm1653, %vm1658
  %vm1664 = vmand %vm1654, %vm1659
  %vm1665 = vmand %vm1655, %vm1660
  %v1666 = vsel %vm1661, %v1637, 4294967295
  %v1667 = vsel %vm1662, %v1639, 4294967295
  %v1668 = vsel %vm1663, %v1641, 4294967295
  %v1669 = vsel %vm1664, %v1643, 4294967295
  %v1670 = vsel %vm1665, %v1645, 4294967295
  %v1671 = vsel %vm100, %v843, %v1666
  %v1672 = vsel %vm101, %v844, %v1667
  %v1673 = vsel %vm102, %v845, %v1668
  %v1674 = vsel %vm103, %v846, %v1669
  %v1675 = vsel %vm104, %v847, %v1670
  %1676 = vst [vmem:[%s1] sm:$0xff] %v1671
  %1677 = vst [vmem:[%s1 + $0x8] sm:$0xff] %v1672
  %1678 = vst [vmem:[%s1 + $0x10] sm:$0xff] %v1673
  %1679 = vst [vmem:[%s1 + $0x18] sm:$0xff] %v1674
  %1680 = vst [vmem:[%s1 + $0x20] sm:$0xff] %v1675
  // Predicated region
  $region13: #{dbscan_cluster.2} parent=0 // pred_check
    _
  $region14: #{dbscan_cluster.2} parent=0 // pred_check_branch
    %1682 = sbr.rel (0) target = $region16
  $region15: #{dbscan_cluster.2} parent=0 // pred_region
    _
  $region16: #{dbscan_cluster.2} parent=0 // pred_fallthru
    _
  // Predicated region
  $region17: #{dbscan_cluster.2} parent=0 // pred_check
    _
  $region18: #{dbscan_cluster.2} parent=0 // pred_check_branch
    %1684 = sbr.rel (0) target = $region20
  $region19: #{dbscan_cluster.2} parent=0 // pred_region
    _
  $region20: #{dbscan_cluster.2} parent=0 // pred_fallthru
    _

// kernel: dbscan_cluster.3
$region0: #{dbscan_cluster.3}
  #allocation0 [shape = 'u32[]', space=smem, size = 0x4, offset = 0x4, fixed_abs, tag = 'smem constant byte address 0x4 - core index']
  #allocation1 [shape = 'u32[144,128]{1,0:T(1,128)}', space=vmem, size = 0x12000, scoped, tag = 'internal scratch']
  %s0 = inlined_call_operand.vmem [shape: s32[1,5120], index: 0, kind: input, shape index: {}]
  %s1 = inlined_call_operand.vmem [shape: u8[26,5120], index: 1, kind: output, shape index: {}]
  %s2 = sld [smem:[#allocation0]]
  $region56: #{dbscan_cluster.3} parent=0
    _
  %s4 = ssub.s32 1, %s2
  %s5 = scalar_select 0, %s4, %s2
  $region1: #{dbscan_cluster.3} parent=0
    #allocation2 [shape = 'u8[65536]{0}', space=vmem, size = 0x10000, scoped, tag = 'output window, operand 0']
    loop: start=0, step=1, limit=7
    $region2: #{dbscan_cluster.3} parent=1 // loop_pre_header
      _
    $region3: #{dbscan_cluster.3} parent=1 // loop_header
      %s7 = sphi 0, %s11
      %p8 = scmp.ge.s32.totalorder %s7, 7
      %s17 = sphi 0, %s19
      %s20 = sphi 0, %s17
      %s21 = sphi 0, %s20
      %s37 = sphi 0, %s21
      %s43 = sphi 0, %s45
      %s46 = sphi 0, %s43
      %s47 = sphi 0, %s46
      %s63 = sphi 0, %s47
    $region4: #{dbscan_cluster.3} parent=1 // loop_header_branch
      %10 = sbr.rel (%p8) target = $region8
    $region5: #{dbscan_cluster.3} parent=1 // loop_body
      %s12 = ssub.s32 %s7, 1
      %s13 = ssub.s32 %s7, 2
      %s14 = sadd.s32 %s7, 1
      %s15 = ssub.s32 %s7, %s14
      %p16 = scmp.eq.s32.totalorder %s15, 0
      %s18 = sadd.s32 %s17, 1
      %s19 = scalar_select %p16, %s17, %s18
      %p22 = pneg %p16
      %p23 = scmp.eq.s32.totalorder %s7, 4
      %p24 = por %p22, %p23
      %p25 = scmp.ne.s32.totalorder %s17, %s20
      %p26 = scmp.eq.s32.totalorder %s7, 0
      %p27 = por %p25, %p26
      %p28 = scmp.ne.s32.totalorder %s17, %s20
      %p29 = scmp.eq.s32.totalorder %s12, 4
      %p30 = por %p28, %p29
      %p31 = scmp.ne.s32.totalorder %s20, %s21
      %p32 = scmp.eq.s32.totalorder %s12, 0
      %p33 = por %p31, %p32
      %p34 = scmp.ne.s32.totalorder %s20, %s21
      %p35 = scmp.eq.s32.totalorder %s13, 4
      %p36 = por %p34, %p35
      %p38 = scmp.ne.s32.totalorder %s21, %s37
      %p39 = scmp.eq.s32.totalorder %s13, 0
      %p40 = por %p38, %p39
      %s41 = ssub.s32 %s7, %s14
      %p42 = scmp.eq.s32.totalorder %s41, 0
      %s44 = sadd.s32 %s43, 1
      %s45 = scalar_select %p42, %s43, %s44
      %p48 = pneg %p42
      %p49 = scmp.eq.s32.totalorder %s7, 4
      %p50 = por %p48, %p49
      %p51 = scmp.ne.s32.totalorder %s43, %s46
      %p52 = scmp.eq.s32.totalorder %s7, 0
      %p53 = por %p51, %p52
      %p54 = scmp.ne.s32.totalorder %s43, %s46
      %p55 = scmp.eq.s32.totalorder %s12, 4
      %p56 = por %p54, %p55
      %p57 = scmp.ne.s32.totalorder %s46, %s47
      %p58 = scmp.eq.s32.totalorder %s12, 0
      %p59 = por %p57, %p58
      %p60 = scmp.ne.s32.totalorder %s46, %s47
      %p61 = scmp.eq.s32.totalorder %s13, 4
      %p62 = por %p60, %p61
      %p64 = scmp.ne.s32.totalorder %s47, %s63
      %p65 = scmp.eq.s32.totalorder %s13, 0
      %p66 = por %p64, %p65
      %p67 = scmp.le.s32.totalorder 1, %s7
      %p68 = scmp.lt.s32.totalorder %s7, 6
      %p69 = pnand %p67, %p68
      %p70 = pneg %p69
      // Predicated region
      $region9: #{dbscan_cluster.3} parent=5 // pred_check
        _
      $region10: #{dbscan_cluster.3} parent=5 // pred_check_branch
        %72 = sbr.rel (%p69) target = $region12
      $region11: #{dbscan_cluster.3} parent=5 // pred_region
        %s73 = ssub.s32 %s7, 1
      $region12: #{dbscan_cluster.3} parent=5 // pred_fallthru
        _
      %p74 = scmp.lt.s32.totalorder %s7, 5
      // Predicated region
      $region13: #{dbscan_cluster.3} parent=5 // pred_check
        %p75 = pneg %p74
      $region14: #{dbscan_cluster.3} parent=5 // pred_check_branch
        %77 = sbr.rel (%p75) target = $region16
      $region15: #{dbscan_cluster.3} parent=5 // pred_region
        // Predicated region
        $region17: #{dbscan_cluster.3} parent=15 // pred_check
          %p78 = pneg %p27
        $region18: #{dbscan_cluster.3} parent=15 // pred_check_branch
          %80 = sbr.rel (%p78) target = $region20
        $region19: #{dbscan_cluster.3} parent=15 // pred_region
          %s81 = smul.u32 8, %s7
          %p82 = scmp.lt.s32.totalorder %s81, 39
          %s83 = scalar_select %p82, %s81, 39
          %s84 = scalar_lea.vmem %s0, %s83
          %s85 = smul.u32 8, %s7
        $region20: #{dbscan_cluster.3} parent=15 // pred_fallthru
          _
      $region16: #{dbscan_cluster.3} parent=5 // pred_fallthru
        _
      %p86 = scmp.le.s32.totalorder 1, %s7
      %p87 = scmp.lt.s32.totalorder %s7, 6
      %p88 = pnand %p86, %p87
      %p89 = pneg %p88
      // Predicated region
      $region21: #{dbscan_cluster.3} parent=5 // pred_check
        _
      $region22: #{dbscan_cluster.3} parent=5 // pred_check_branch
        %91 = sbr.rel (%p88) target = $region24
      $region23: #{dbscan_cluster.3} parent=5 // pred_region
        %s92 = ssub.s32 %s7, 1
        %s93 = smul.u32 8, %s12
        %p94 = scmp.lt.s32.totalorder %s93, 39
        %s95 = scalar_select %p94, %s93, 39
        %s96 = scalar_lea.vmem %s0, %s95
        %p97 = pneg %p33
        %p98 = pneg %p30
        %p99 = pneg %p59
        %p100 = pneg %p56
        %s101 = sand.u32 %s46, 1
        %s102 = sand.u32 %s46, 1
        %s103 = smul.addr %s102, 64
        %s104 = scalar_lea.vmem [#allocation2], %s103
        %s105 = smul.u32 8, %s12
        %p106 = scmp.lt.s32.totalorder %s105, 39
        %s107 = scalar_select %p106, %s105, 39
        %s108 = scalar_lea.vmem %s0, %s107
        %s109 = smul.u32 8, %s12
        %s110 = smul.u32 8, %s12
        %v113 = vld [vmem:[%s108] sm:$0xff]
        %v114 = vlaneseq
        %v115 = vshrl.u32 %v114, 7
        %v116 = vadd.s32 %v115, 8
        %v117 = vadd.s32 %v115, 16
        %v118 = vadd.s32 %v115, 24
        %v119 = vlaneseq
        %v120 = vshrl.u32 %v119, 7
        %v121 = vsub.s32 0, %v120
        %v122 = vrot.slane %v113, %v121
        %v123 = vlaneseq
        %v124 = vshrl.u32 %v123, 7
        %v125 = vsub.s32 1, %v124
        %v126 = vrot.slane %v113, %v125
        %v127 = vlaneseq
        %v128 = vshrl.u32 %v127, 7
        %v129 = vsub.s32 2, %v128
        %v130 = vrot.slane %v113, %v129
        %v131 = vlaneseq
        %v132 = vshrl.u32 %v131, 7
        %v133 = vsub.s32 3, %v132
        %v134 = vrot.slane %v113, %v133
        %v135 = vlaneseq
        %v136 = vshrl.u32 %v135, 7
        %v137 = vsub.s32 4, %v136
        %v138 = vrot.slane %v113, %v137
        %v139 = vlaneseq
        %v140 = vshrl.u32 %v139, 7
        %v141 = vsub.s32 5, %v140
        %v142 = vrot.slane %v113, %v141
        %v143 = vlaneseq
        %v144 = vshrl.u32 %v143, 7
        %v145 = vsub.s32 6, %v144
        %v146 = vrot.slane %v113, %v145
        %v147 = vlaneseq
        %v148 = vshrl.u32 %v147, 7
        %v149 = vsub.s32 7, %v148
        %v150 = vrot.slane %v113, %v149
        %vm151 = vcmp.eq.s32.totalorder %v122, %v115
        %vm152 = vcmp.eq.s32.totalorder %v126, %v115
        %vm153 = vcmp.eq.s32.totalorder %v130, %v115
        %vm154 = vcmp.eq.s32.totalorder %v134, %v115
        %vm155 = vcmp.eq.s32.totalorder %v138, %v115
        %vm156 = vcmp.eq.s32.totalorder %v142, %v115
        %vm157 = vcmp.eq.s32.totalorder %v146, %v115
        %vm158 = vcmp.eq.s32.totalorder %v150, %v115
        %vm159 = vcmp.eq.s32.totalorder %v122, %v116
        %vm160 = vcmp.eq.s32.totalorder %v126, %v116
        %vm161 = vcmp.eq.s32.totalorder %v130, %v116
        %vm162 = vcmp.eq.s32.totalorder %v134, %v116
        %vm163 = vcmp.eq.s32.totalorder %v138, %v116
        %vm164 = vcmp.eq.s32.totalorder %v142, %v116
        %vm165 = vcmp.eq.s32.totalorder %v146, %v116
        %vm166 = vcmp.eq.s32.totalorder %v150, %v116
        %vm167 = vcmp.eq.s32.totalorder %v122, %v117
        %vm168 = vcmp.eq.s32.totalorder %v126, %v117
        %vm169 = vcmp.eq.s32.totalorder %v130, %v117
        %vm170 = vcmp.eq.s32.totalorder %v134, %v117
        %vm171 = vcmp.eq.s32.totalorder %v138, %v117
        %vm172 = vcmp.eq.s32.totalorder %v142, %v117
        %vm173 = vcmp.eq.s32.totalorder %v146, %v117
        %vm174 = vcmp.eq.s32.totalorder %v150, %v117
        %vm175 = vcmp.eq.s32.totalorder %v122, %v118
        %vm176 = vcmp.eq.s32.totalorder %v126, %v118
        %vm177 = vcmp.eq.s32.totalorder %v130, %v118
        %vm178 = vcmp.eq.s32.totalorder %v134, %v118
        %vm179 = vcmp.eq.s32.totalorder %v138, %v118
        %vm180 = vcmp.eq.s32.totalorder %v142, %v118
        %vm181 = vcmp.eq.s32.totalorder %v146, %v118
        %vm182 = vcmp.eq.s32.totalorder %v150, %v118
        %vm183 = vmpackc.low %vm159, %vm151
        %vm184 = vmpackc.low %vm175, %vm167
        %vm185 = vmpackc.even %vm184, %vm183
        %vm186 = vmpackc.low %vm160, %vm152
        %vm187 = vmpackc.low %vm176, %vm168
        %vm188 = vmpackc.even %vm187, %vm186
        %vm189 = vmpackc.low %vm161, %vm153
        %vm190 = vmpackc.low %vm177, %vm169
        %vm191 = vmpackc.even %vm190, %vm189
        %vm192 = vmpackc.low %vm162, %vm154
        %vm193 = vmpackc.low %vm178, %vm170
        %vm194 = vmpackc.even %vm193, %vm192
        %vm195 = vmpackc.low %vm163, %vm155
        %vm196 = vmpackc.low %vm179, %vm171
        %vm197 = vmpackc.even %vm196, %vm195
        %vm198 = vmpackc.low %vm164, %vm156
        %vm199 = vmpackc.low %vm180, %vm172
        %vm200 = vmpackc.even %vm199, %vm198
        %vm201 = vmpackc.low %vm165, %vm157
        %vm202 = vmpackc.low %vm181, %vm173
        %vm203 = vmpackc.even %vm202, %vm201
        %vm204 = vmpackc.low %vm166, %vm158
        %vm205 = vmpackc.low %vm182, %vm174
        %vm206 = vmpackc.even %vm205, %vm204
        %v207 = vsel %vm185, 16843009, 0
        %v208 = vsel %vm188, 16843009, 0
        %v209 = vsel %vm191, 16843009, 0
        %v210 = vsel %vm194, 16843009, 0
        %v211 = vsel %vm197, 16843009, 0
        %v212 = vsel %vm200, 16843009, 0
        %v213 = vsel %vm203, 16843009, 0
        %v214 = vsel %vm206, 16843009, 0
        %v215 = vunpack.c.0.s8 %v207
        %v216 = vunpack.c.0.s8 %v208
        %v217 = vunpack.c.0.s8 %v209
        %v218 = vunpack.c.0.s8 %v210
        %v219 = vunpack.c.0.s8 %v211
        %v220 = vunpack.c.0.s8 %v212
        %v221 = vunpack.c.0.s8 %v213
        %v222 = vunpack.c.0.s8 %v214
        %v223 = vunpack.c.1.s8 %v207
        %v224 = vunpack.c.1.s8 %v208
        %v225 = vunpack.c.1.s8 %v209
        %v226 = vunpack.c.1.s8 %v210
        %v227 = vunpack.c.1.s8 %v211
        %v228 = vunpack.c.1.s8 %v212
        %v229 = vunpack.c.1.s8 %v213
        %v230 = vunpack.c.1.s8 %v214
        %v231 = vunpack.c.2.s8 %v207
        %v232 = vunpack.c.2.s8 %v208
        %v233 = vunpack.c.2.s8 %v209
        %v234 = vunpack.c.2.s8 %v210
        %v235 = vunpack.c.2.s8 %v211
        %v236 = vunpack.c.2.s8 %v212
        %v237 = vunpack.c.2.s8 %v213
        %v238 = vunpack.c.2.s8 %v214
        %v239 = vunpack.c.3.s8 %v207
        %v240 = vunpack.c.3.s8 %v208
        %v241 = vunpack.c.3.s8 %v209
        %v242 = vunpack.c.3.s8 %v210
        %v243 = vunpack.c.3.s8 %v211
        %v244 = vunpack.c.3.s8 %v212
        %v245 = vunpack.c.3.s8 %v213
        %v246 = vunpack.c.3.s8 %v214
        %v247 = vpack.c.b16 %v216, %v215
        %v248 = vpack.c.b16 %v218, %v217
        %v249 = vpack.c.b8 %v248, %v247
        %v250 = vpack.c.b16 %v220, %v219
        %v251 = vpack.c.b16 %v222, %v221
        %v252 = vpack.c.b8 %v251, %v250
        %v253 = vpack.c.b16 %v224, %v223
        %v254 = vpack.c.b16 %v226, %v225
        %v255 = vpack.c.b8 %v254, %v253
        %v256 = vpack.c.b16 %v228, %v227
        %v257 = vpack.c.b16 %v230, %v229
        %v258 = vpack.c.b8 %v257, %v256
        %v259 = vpack.c.b16 %v232, %v231
        %v260 = vpack.c.b16 %v234, %v233
        %v261 = vpack.c.b8 %v260, %v259
        %v262 = vpack.c.b16 %v236, %v235
        %v263 = vpack.c.b16 %v238, %v237
        %v264 = vpack.c.b8 %v263, %v262
        %v265 = vpack.c.b16 %v240, %v239
        %v266 = vpack.c.b16 %v242, %v241
        %v267 = vpack.c.b8 %v266, %v265
        %v268 = vpack.c.b16 %v244, %v243
        %v269 = vpack.c.b16 %v246, %v245
        %v270 = vpack.c.b8 %v269, %v268
        %271 = vst [vmem:[%s104] sm:$0xff] %v249
        %272 = vst [vmem:[%s104 + $0x8] sm:$0xff] %v252
        %273 = vst [vmem:[%s104 + $0x10] sm:$0xff] %v255
        %274 = vst [vmem:[%s104 + $0x18] sm:$0xff] %v258
        %275 = vst [vmem:[%s104 + $0x20] sm:$0xff] %v261
        %276 = vst [vmem:[%s104 + $0x28] sm:$0xff] %v264
        %vm277 = vcmask 1040384
        %vm278 = vsmask.f32 256
        %vm279 = vmand %vm277, %vm278
        %vm280 = vcmask 1042434
        %vm281 = vsmask.f32 2304
        %vm282 = vmand %vm280, %vm281
        %vm283 = vmor %vm282, %vm279
        %vm284 = vcmask 1044484
        %vm285 = vsmask.f32 4352
        %vm286 = vmand %vm284, %vm285
        %vm287 = vmor %vm286, %vm283
        %vm288 = vcmask 1046534
        %vm289 = vsmask.f32 6400
        %vm290 = vmand %vm288, %vm289
        %vm291 = vmor %vm290, %vm287
        %v292 = vld [vmem:[%s104 + $0x30] sm:$0x55]
        %v293 = vsel %vm291, %v267, %v292
        %294 = vst [vmem:[%s104 + $0x30] sm:$0x55] %v293
        %v295 = vld [vmem:[%s104 + $0x38] sm:$0x55]
        %v296 = vsel %vm291, %v270, %v295
        %297 = vst [vmem:[%s104 + $0x38] sm:$0x55] %v296
        %s298 = sand.u32 %s46, 1
        %s299 = sand.u32 %s46, 1
        %s300 = smul.addr %s299, 64
        %s301 = scalar_lea.vmem [#allocation2], %s300
        // Predicated region
        $region25: #{dbscan_cluster.3} parent=23 // pred_check
          %p302 = pneg %p56
        $region26: #{dbscan_cluster.3} parent=23 // pred_check_branch
          %304 = sbr.rel (%p302) target = $region28
        $region27: #{dbscan_cluster.3} parent=23 // pred_region
          %s305 = smul.u32 8, %s12
          %s306 = smul.addr %s305, 2
          %s307 = scalar_lea.vmem %s1, %s306
          // Predicated region
          $region29: #{dbscan_cluster.3} parent=27 // pred_check
            _
          $region30: #{dbscan_cluster.3} parent=27 // pred_check_branch
            %309 = sbr.rel (0) target = $region32
          $region31: #{dbscan_cluster.3} parent=27 // pred_region
            // Predicated region
            $region33: #{dbscan_cluster.3} parent=31 // pred_check
              _
            $region34: #{dbscan_cluster.3} parent=31 // pred_check_branch
              %311 = sbr.rel (0) target = $region36
            $region35: #{dbscan_cluster.3} parent=31 // pred_region
              loop: start=0, step=1, limit=1
              $region37: #{dbscan_cluster.3} parent=35 // loop_pre_header
                _
              $region38: #{dbscan_cluster.3} parent=35 // loop_header
                %s313 = sphi 0, %s317
                %p314 = scmp.ge.s32.totalorder %s313, 1
                %s318 = sphi %s301, %s301
                %s319 = sphi %s307, %s307
              $region39: #{dbscan_cluster.3} parent=35 // loop_header_branch
                %316 = sbr.rel (%p314) target = $region43
              $region40: #{dbscan_cluster.3} parent=35 // loop_body
                %v320 = vld [vmem:[%s318] sm:$0xff]
                %321 = vst [vmem:[%s319] sm:$0xff] %v320
                %v322 = vld [vmem:[%s318 + $0x8] sm:$0xff]
                %323 = vst [vmem:[%s319 + $0x8] sm:$0xff] %v322
                %v324 = vld [vmem:[%s318 + $0x10] sm:$0xff]
                %325 = vst [vmem:[%s319 + $0x50] sm:$0xff] %v324
                %v326 = vld [vmem:[%s318 + $0x18] sm:$0xff]
                %327 = vst [vmem:[%s319 + $0x58] sm:$0xff] %v326
                %v328 = vld [vmem:[%s318 + $0x20] sm:$0xff]
                %329 = vst [vmem:[%s319 + $0xa0] sm:$0xff] %v328
                %v330 = vld [vmem:[%s318 + $0x28] sm:$0xff]
                %331 = vst [vmem:[%s319 + $0xa8] sm:$0xff] %v330
                %v332 = vld [vmem:[%s318 + $0x30] sm:$0xff]
                %333 = vst [vmem:[%s319 + $0xf0] sm:$0xff] %v332
                %v334 = vld [vmem:[%s318 + $0x38] sm:$0xff]
                %335 = vst [vmem:[%s319 + $0xf8] sm:$0xff] %v334
              $region41: #{dbscan_cluster.3} parent=35 // loop_footer
                %s317 = sadd.s32 1, %s313
              $region42: #{dbscan_cluster.3} parent=35 // loop_footer_branch
                %312 = sbr.rel target = $region38
              $region43: #{dbscan_cluster.3} parent=35 // loop_exit
                _
            $region36: #{dbscan_cluster.3} parent=31 // pred_fallthru
              _
            // Predicated region
            $region44: #{dbscan_cluster.3} parent=31 // pred_check
              _
            $region45: #{dbscan_cluster.3} parent=31 // pred_check_branch
              %337 = sbr.rel target = $region47
            $region46: #{dbscan_cluster.3} parent=31 // pred_region
              _
            $region47: #{dbscan_cluster.3} parent=31 // pred_fallthru
              _
          $region32: #{dbscan_cluster.3} parent=27 // pred_fallthru
            _
          %338 = vnop
        $region28: #{dbscan_cluster.3} parent=23 // pred_fallthru
          _
      $region24: #{dbscan_cluster.3} parent=5 // pred_fallthru
        _
      %p339 = scmp.le.s32.totalorder 2, %s7
      // Predicated region
      $region48: #{dbscan_cluster.3} parent=5 // pred_check
        %p340 = pneg %p339
      $region49: #{dbscan_cluster.3} parent=5 // pred_check_branch
        %342 = sbr.rel (%p340) target = $region51
      $region50: #{dbscan_cluster.3} parent=5 // pred_region
        %s343 = ssub.s32 %s7, 2
        // Predicated region
        $region52: #{dbscan_cluster.3} parent=50 // pred_check
          %p344 = pneg %p62
        $region53: #{dbscan_cluster.3} parent=50 // pred_check_branch
          %346 = sbr.rel (%p344) target = $region55
        $region54: #{dbscan_cluster.3} parent=50 // pred_region
          %s347 = sand.u32 %s47, 1
          %s348 = sand.u32 %s47, 1
          %s349 = smul.addr %s348, 64
          %s350 = scalar_lea.vmem [#allocation2], %s349
        $region55: #{dbscan_cluster.3} parent=50 // pred_fallthru
          _
      $region51: #{dbscan_cluster.3} parent=5 // pred_fallthru
        _
    $region6: #{dbscan_cluster.3} parent=1 // loop_footer
      %s11 = sadd.s32 1, %s7
    $region7: #{dbscan_cluster.3} parent=1 // loop_footer_branch
      %6 = sbr.rel target = $region3
    $region8: #{dbscan_cluster.3} parent=1 // loop_exit
      _

</llo_original>
